<compile_context>
chip_gen: v6e
topology: v6e:2x2x1
jax: 0.10.0
libtpu: 0.0.40
codegen_flags: <defaults>
</compile_context>

<pallas_src>
import functools

import jax
import jax.numpy as jnp
from jax.experimental import pallas as pl
from jax.experimental.pallas import tpu as pltpu

INPUT_DIM = 784
CONDITION_DIM = 10
HIDDEN_DIM = 400
LATENT_DIM = 20
HEAD_PAD = 128                      # lane-dense fused-head width (>= 2*LATENT_DIM)


def _round_up(n, m):
    return ((n + m - 1) // m) * m


def encoder_kernel(x_ref, c_ref, w1x_ref, w1c_ref, b1_ref,
                   w2_ref, b2_ref, wh_ref, bh_ref, out_ref):
    # encoder[0]: Linear(combined -> hidden) + ReLU.  The torch.cat([x, c]) is
    # fused away: x goes through the MXU (bf16 operands, fp32 accumulation),
    # and the tiny condition_dim=10 contribution is done as 10 fp32 VPU
    # broadcast-FMAs added to the accumulator (no near-empty MXU pass).
    xb = x_ref[...].astype(w1x_ref.dtype)          # cast inside kernel (free under MXU slack)
    acc = jnp.dot(xb, w1x_ref[...], preferred_element_type=jnp.float32) + b1_ref[...]
    cc = c_ref[...]                                 # (tb, C) fp32
    w1c = w1c_ref[...]                              # (C, H) fp32
    for k in range(CONDITION_DIM):                  # static unroll: 10 VPU FMAs
        acc = acc + cc[:, k:k + 1] * w1c[k:k + 1, :]
    h1 = jnp.maximum(acc, 0.0)                      # fp32 elementwise (v5e-friendly)

    # encoder[2]: Linear(hidden -> hidden) + ReLU
    h2 = jnp.dot(h1.astype(w2_ref.dtype), w2_ref[...],
                 preferred_element_type=jnp.float32) + b2_ref[...]
    h2 = jnp.maximum(h2, 0.0)

    # Fused lane-dense heads: [mu | logvar | zero-pad] = h2 @ Wh + bh, width 128
    out_ref[...] = (jnp.dot(h2.astype(wh_ref.dtype), wh_ref[...],
                            preferred_element_type=jnp.float32)
                    + bh_ref[...]).astype(out_ref.dtype)


@functools.partial(jax.jit, static_argnames=("block_b",))
def encoder_forward(x, c, params, *, block_b=512):
    """x: (B, input_dim) f32, c: (B, condition_dim) f32 -> (mu, logvar) f32 (B, latent)."""
    w1x, w1c, b1, w2, b2, wh, bh = params
    B = x.shape[0]
    D, H = w1x.shape
    C = w1c.shape[0]
    OUT = wh.shape[1]                      # lane-padded fused-head width (128)

    # Batch tile: multiple of 16 sublanes (bf16 packing), capped at block_b.
    tb = min(block_b, _round_up(B, 16))
    # v7x megacore: if one tile would cover the whole batch, halve it so the
    # grid has >= 2 steps and both TensorCores get work.
    if _round_up(B, tb) == tb and B > 16:
        tb = max(16, _round_up((B + 1) // 2, 16))
    Bp = _round_up(B, tb)
    if Bp != B:
        x = jnp.pad(x, ((0, Bp - B), (0, 0)))
        c = jnp.pad(c, ((0, Bp - B), (0, 0)))

    # Activations / outputs tile over the batch grid; weights & biases use a
    # constant block index so they are DMA'd once and stay resident in VMEM.
    # (pipeline_mode=pl.Buffered(1) on the resident operands would halve their
    #  double-buffer VMEM; left at defaults for portability — low absolute win.)
    act_spec = lambda f: pl.BlockSpec((tb, f), lambda i: (i, 0))
    res_spec = lambda s: pl.BlockSpec(s, lambda i: (0, 0))

    out = pl.pallas_call(
        encoder_kernel,
        grid=(Bp // tb,),
        out_shape=jax.ShapeDtypeStruct((Bp, OUT), jnp.float32),
        in_specs=[act_spec(D), act_spec(C),
                  res_spec((D, H)), res_spec((C, H)), res_spec((1, H)),
                  res_spec((H, H)), res_spec((1, H)),
                  res_spec((H, OUT)), res_spec((1, OUT))],
        out_specs=act_spec(OUT),
        compiler_params=pltpu.CompilerParams(
            dimension_semantics=("parallel",),
            vmem_limit_bytes=24 << 20),
    )(x, c, w1x, w1c, b1, w2, b2, wh, bh)

    out = out[:B]
    return out[:, :LATENT_DIM], out[:, LATENT_DIM:2 * LATENT_DIM]


def init_params(key, wdtype=jnp.bfloat16):
    """nn.Linear-style init (U(-1/sqrt(fan_in), 1/sqrt(fan_in))), repacked for
    the kernel: W1 split at input_dim (x-part bf16 for the MXU, c-part fp32
    for the VPU FMAs), heads fused and lane-padded to 128 with exact zeros,
    biases kept fp32."""

    def linear(k, fan_in, fan_out):
        kw, kb = jax.random.split(k)
        bound = 1.0 / jnp.sqrt(float(fan_in))
        w = jax.random.uniform(kw, (fan_in, fan_out), jnp.float32, -bound, bound)
        b = jax.random.uniform(kb, (1, fan_out), jnp.float32, -bound, bound)
        return w, b

    combined = INPUT_DIM + CONDITION_DIM
    k1, k2, k3, k4 = jax.random.split(key, 4)
    w1, b1 = linear(k1, combined, HIDDEN_DIM)
    w2, b2 = linear(k2, HIDDEN_DIM, HIDDEN_DIM)
    wmu, bmu = linear(k3, HIDDEN_DIM, LATENT_DIM)
    wlv, blv = linear(k4, HIDDEN_DIM, LATENT_DIM)

    w1x = w1[:INPUT_DIM].astype(wdtype)                        # (784, H) bf16 (MXU)
    w1c = w1[INPUT_DIM:]                                       # (10,  H) fp32 (VPU FMAs)
    pad = HEAD_PAD - 2 * LATENT_DIM
    wh = jnp.pad(jnp.concatenate([wmu, wlv], axis=1),
                 ((0, 0), (0, pad))).astype(wdtype)            # (H, 128) bf16, zero-padded
    bh = jnp.pad(jnp.concatenate([bmu, blv], axis=1),
                 ((0, 0), (0, pad)))                           # (1, 128) fp32, zero-padded
    # TODO(synk): optional fp8 (e4m3) weight path for v7x / int8 for v6e is not implemented.
    return (w1x, w1c, b1, w2.astype(wdtype), b2, wh, bh)


def encoder_reference_bf16(x, c, params):
    """Pure-JAX reference mirroring the kernel's dtype choices (bf16 MXU operands,
    fp32 accumulation, fp32 condition contribution)."""
    w1x, w1c, b1, w2, b2, wh, bh = params
    dot = lambda a, b: jnp.dot(a, b, preferred_element_type=jnp.float32)
    h = dot(x.astype(w1x.dtype), w1x) + (c @ w1c) + b1
    h = jnp.maximum(h, 0.0)
    h = jnp.maximum(dot(h.astype(w2.dtype), w2) + b2, 0.0)
    out = dot(h.astype(wh.dtype), wh) + bh
    return out[:, :LATENT_DIM], out[:, LATENT_DIM:2 * LATENT_DIM]


def encoder_reference_fp32(x, c, params):
    """Pure-JAX fp32 reference of the original PyTorch forward (semantics check)."""
    w1x, w1c, b1, w2, b2, wh, bh = params
    w1 = jnp.concatenate([w1x.astype(jnp.float32), w1c], axis=0)
    xc = jnp.concatenate([x, c], axis=1)
    h = jnp.maximum(xc @ w1 + b1, 0.0)
    h = jnp.maximum(h @ w2.astype(jnp.float32) + b2, 0.0)
    out = h @ wh.astype(jnp.float32) + bh
    return out[:, :LATENT_DIM], out[:, LATENT_DIM:2 * LATENT_DIM]


if __name__ == "__main__":
    key = jax.random.PRNGKey(0)
    kx, kc, kp = jax.random.split(key, 3)

    B = 8
    x = jax.random.normal(kx, (B, INPUT_DIM), jnp.float32)
    c = jax.random.normal(kc, (B, CONDITION_DIM), jnp.float32)
    params = init_params(kp)

    mu, logvar = jax.block_until_ready(encoder_forward(x, c, params))
    assert mu.shape == (B, LATENT_DIM) and logvar.shape == (B, LATENT_DIM)

    # Tight check against a reference with identical dtype choices.
    mu_b, lv_b = encoder_reference_bf16(x, c, params)
    assert jnp.allclose(mu, mu_b, atol=2e-3, rtol=2e-3)
    assert jnp.allclose(logvar, lv_b, atol=2e-3, rtol=2e-3)

    # Looser check against the fp32 PyTorch-equivalent forward (bf16 weights).
    mu_f, lv_f = encoder_reference_fp32(x, c, params)
    assert jnp.allclose(mu, mu_f, atol=5e-2, rtol=5e-2)
    assert jnp.allclose(logvar, lv_f, atol=5e-2, rtol=5e-2)

    # Exercise a batch large enough to hit the multi-tile / 2-grid-step path.
    B2 = 600
    x2 = jax.random.normal(kx, (B2, INPUT_DIM), jnp.float32)
    c2 = jax.random.normal(kc, (B2, CONDITION_DIM), jnp.float32)
    mu2, lv2 = jax.block_until_ready(encoder_forward(x2, c2, params))
    mu2_b, lv2_b = encoder_reference_bf16(x2, c2, params)
    assert jnp.allclose(mu2, mu2_b, atol=2e-3, rtol=2e-3)
    assert jnp.allclose(lv2, lv2_b, atol=2e-3, rtol=2e-3)

    print("KERNEL_OK")
</pallas_src>

<mosaic_0001>
module attributes {stable_mosaic.version = 11 : i64} {
  func.func @encoder_kernel(%arg0: i32, %arg1: memref<16x784xf32, #tpu.memory_space<vmem>>, %arg2: memref<16x10xf32, #tpu.memory_space<vmem>>, %arg3: memref<784x400xbf16, #tpu.memory_space<vmem>>, %arg4: memref<10x400xf32, #tpu.memory_space<vmem>>, %arg5: memref<1x400xf32, #tpu.memory_space<vmem>>, %arg6: memref<400x400xbf16, #tpu.memory_space<vmem>>, %arg7: memref<1x400xf32, #tpu.memory_space<vmem>>, %arg8: memref<400x128xbf16, #tpu.memory_space<vmem>>, %arg9: memref<1x128xf32, #tpu.memory_space<vmem>>, %arg10: memref<16x128xf32, #tpu.memory_space<vmem>>) attributes {dimension_semantics = [#tpu.dimension_semantics<parallel>], iteration_bounds = array<i64: 1>, scalar_prefetch = 0 : i64, scratch_operands = 0 : i64, tpu.core_type = #tpu.core_type<tc>, window_params = [{transform_indices = @transform_0, window_bounds = array<i64: 16, 784>}, {transform_indices = @transform_1, window_bounds = array<i64: 16, 10>}, {pipeline_mode = #tpu.pipeline_mode<synchronous>, transform_indices = @transform_2, window_bounds = array<i64: 784, 400>}, {pipeline_mode = #tpu.pipeline_mode<synchronous>, transform_indices = @transform_3, window_bounds = array<i64: 10, 400>}, {pipeline_mode = #tpu.pipeline_mode<synchronous>, transform_indices = @transform_4, window_bounds = array<i64: 1, 400>}, {pipeline_mode = #tpu.pipeline_mode<synchronous>, transform_indices = @transform_5, window_bounds = array<i64: 400, 400>}, {pipeline_mode = #tpu.pipeline_mode<synchronous>, transform_indices = @transform_6, window_bounds = array<i64: 1, 400>}, {pipeline_mode = #tpu.pipeline_mode<synchronous>, transform_indices = @transform_7, window_bounds = array<i64: 400, 128>}, {pipeline_mode = #tpu.pipeline_mode<synchronous>, transform_indices = @transform_8, window_bounds = array<i64: 1, 128>}, {transform_indices = @transform_9, window_bounds = array<i64: 16, 128>}]} {
    %c0 = arith.constant 0 : index
    %c0_0 = arith.constant 0 : index
    %0 = vector.load %arg1[%c0, %c0_0] : memref<16x784xf32, #tpu.memory_space<vmem>>, vector<16x784xf32>
    %1 = arith.truncf %0 : vector<16x784xf32> to vector<16x784xbf16>
    %c0_1 = arith.constant 0 : index
    %c0_2 = arith.constant 0 : index
    %2 = vector.load %arg3[%c0_1, %c0_2] : memref<784x400xbf16, #tpu.memory_space<vmem>>, vector<784x400xbf16>
    %cst = arith.constant dense<0.000000e+00> : vector<16x400xf32>
    %3 = tpu.matmul %1, %2, %cst {dimension_numbers = #tpu.dot_dimension_numbers<[1], [0], [0], [1], [0, 0, 1, 1], [], []>} : vector<16x784xbf16>, vector<784x400xbf16>, vector<16x400xf32> -> vector<16x400xf32>
    %c0_3 = arith.constant 0 : index
    %c0_4 = arith.constant 0 : index
    %4 = vector.load %arg5[%c0_3, %c0_4] : memref<1x400xf32, #tpu.memory_space<vmem>>, vector<1x400xf32>
    %5 = vector.broadcast %4 : vector<1x400xf32> to vector<16x400xf32>
    %6 = arith.addf %3, %5 : vector<16x400xf32>
    %c0_5 = arith.constant 0 : index
    %c0_6 = arith.constant 0 : index
    %7 = vector.load %arg2[%c0_5, %c0_6] : memref<16x10xf32, #tpu.memory_space<vmem>>, vector<16x10xf32>
    %c0_7 = arith.constant 0 : index
    %c0_8 = arith.constant 0 : index
    %8 = vector.load %arg4[%c0_7, %c0_8] : memref<10x400xf32, #tpu.memory_space<vmem>>, vector<10x400xf32>
    %9 = vector.extract_strided_slice %7 {offsets = [0, 0], sizes = [16, 1], strides = [1, 1]} : vector<16x10xf32> to vector<16x1xf32>
    %10 = vector.extract_strided_slice %8 {offsets = [0, 0], sizes = [1, 400], strides = [1, 1]} : vector<10x400xf32> to vector<1x400xf32>
    %11 = vector.broadcast %9 : vector<16x1xf32> to vector<16x400xf32>
    %12 = vector.broadcast %10 : vector<1x400xf32> to vector<16x400xf32>
    %13 = arith.mulf %11, %12 : vector<16x400xf32>
    %14 = arith.addf %6, %13 : vector<16x400xf32>
    %15 = vector.extract_strided_slice %7 {offsets = [0, 1], sizes = [16, 1], strides = [1, 1]} : vector<16x10xf32> to vector<16x1xf32>
    %16 = vector.extract_strided_slice %8 {offsets = [1, 0], sizes = [1, 400], strides = [1, 1]} : vector<10x400xf32> to vector<1x400xf32>
    %17 = vector.broadcast %15 : vector<16x1xf32> to vector<16x400xf32>
    %18 = vector.broadcast %16 : vector<1x400xf32> to vector<16x400xf32>
    %19 = arith.mulf %17, %18 : vector<16x400xf32>
    %20 = arith.addf %14, %19 : vector<16x400xf32>
    %21 = vector.extract_strided_slice %7 {offsets = [0, 2], sizes = [16, 1], strides = [1, 1]} : vector<16x10xf32> to vector<16x1xf32>
    %22 = vector.extract_strided_slice %8 {offsets = [2, 0], sizes = [1, 400], strides = [1, 1]} : vector<10x400xf32> to vector<1x400xf32>
    %23 = vector.broadcast %21 : vector<16x1xf32> to vector<16x400xf32>
    %24 = vector.broadcast %22 : vector<1x400xf32> to vector<16x400xf32>
    %25 = arith.mulf %23, %24 : vector<16x400xf32>
    %26 = arith.addf %20, %25 : vector<16x400xf32>
    %27 = vector.extract_strided_slice %7 {offsets = [0, 3], sizes = [16, 1], strides = [1, 1]} : vector<16x10xf32> to vector<16x1xf32>
    %28 = vector.extract_strided_slice %8 {offsets = [3, 0], sizes = [1, 400], strides = [1, 1]} : vector<10x400xf32> to vector<1x400xf32>
    %29 = vector.broadcast %27 : vector<16x1xf32> to vector<16x400xf32>
    %30 = vector.broadcast %28 : vector<1x400xf32> to vector<16x400xf32>
    %31 = arith.mulf %29, %30 : vector<16x400xf32>
    %32 = arith.addf %26, %31 : vector<16x400xf32>
    %33 = vector.extract_strided_slice %7 {offsets = [0, 4], sizes = [16, 1], strides = [1, 1]} : vector<16x10xf32> to vector<16x1xf32>
    %34 = vector.extract_strided_slice %8 {offsets = [4, 0], sizes = [1, 400], strides = [1, 1]} : vector<10x400xf32> to vector<1x400xf32>
    %35 = vector.broadcast %33 : vector<16x1xf32> to vector<16x400xf32>
    %36 = vector.broadcast %34 : vector<1x400xf32> to vector<16x400xf32>
    %37 = arith.mulf %35, %36 : vector<16x400xf32>
    %38 = arith.addf %32, %37 : vector<16x400xf32>
    %39 = vector.extract_strided_slice %7 {offsets = [0, 5], sizes = [16, 1], strides = [1, 1]} : vector<16x10xf32> to vector<16x1xf32>
    %40 = vector.extract_strided_slice %8 {offsets = [5, 0], sizes = [1, 400], strides = [1, 1]} : vector<10x400xf32> to vector<1x400xf32>
    %41 = vector.broadcast %39 : vector<16x1xf32> to vector<16x400xf32>
    %42 = vector.broadcast %40 : vector<1x400xf32> to vector<16x400xf32>
    %43 = arith.mulf %41, %42 : vector<16x400xf32>
    %44 = arith.addf %38, %43 : vector<16x400xf32>
    %45 = vector.extract_strided_slice %7 {offsets = [0, 6], sizes = [16, 1], strides = [1, 1]} : vector<16x10xf32> to vector<16x1xf32>
    %46 = vector.extract_strided_slice %8 {offsets = [6, 0], sizes = [1, 400], strides = [1, 1]} : vector<10x400xf32> to vector<1x400xf32>
    %47 = vector.broadcast %45 : vector<16x1xf32> to vector<16x400xf32>
    %48 = vector.broadcast %46 : vector<1x400xf32> to vector<16x400xf32>
    %49 = arith.mulf %47, %48 : vector<16x400xf32>
    %50 = arith.addf %44, %49 : vector<16x400xf32>
    %51 = vector.extract_strided_slice %7 {offsets = [0, 7], sizes = [16, 1], strides = [1, 1]} : vector<16x10xf32> to vector<16x1xf32>
    %52 = vector.extract_strided_slice %8 {offsets = [7, 0], sizes = [1, 400], strides = [1, 1]} : vector<10x400xf32> to vector<1x400xf32>
    %53 = vector.broadcast %51 : vector<16x1xf32> to vector<16x400xf32>
    %54 = vector.broadcast %52 : vector<1x400xf32> to vector<16x400xf32>
    %55 = arith.mulf %53, %54 : vector<16x400xf32>
    %56 = arith.addf %50, %55 : vector<16x400xf32>
    %57 = vector.extract_strided_slice %7 {offsets = [0, 8], sizes = [16, 1], strides = [1, 1]} : vector<16x10xf32> to vector<16x1xf32>
    %58 = vector.extract_strided_slice %8 {offsets = [8, 0], sizes = [1, 400], strides = [1, 1]} : vector<10x400xf32> to vector<1x400xf32>
    %59 = vector.broadcast %57 : vector<16x1xf32> to vector<16x400xf32>
    %60 = vector.broadcast %58 : vector<1x400xf32> to vector<16x400xf32>
    %61 = arith.mulf %59, %60 : vector<16x400xf32>
    %62 = arith.addf %56, %61 : vector<16x400xf32>
    %63 = vector.extract_strided_slice %7 {offsets = [0, 9], sizes = [16, 1], strides = [1, 1]} : vector<16x10xf32> to vector<16x1xf32>
    %64 = vector.extract_strided_slice %8 {offsets = [9, 0], sizes = [1, 400], strides = [1, 1]} : vector<10x400xf32> to vector<1x400xf32>
    %65 = vector.broadcast %63 : vector<16x1xf32> to vector<16x400xf32>
    %66 = vector.broadcast %64 : vector<1x400xf32> to vector<16x400xf32>
    %67 = arith.mulf %65, %66 : vector<16x400xf32>
    %68 = arith.addf %62, %67 : vector<16x400xf32>
    %cst_9 = arith.constant 0.000000e+00 : f32
    %69 = vector.broadcast %cst_9 : f32 to vector<16x400xf32>
    %70 = arith.maximumf %68, %69 : vector<16x400xf32>
    %71 = arith.truncf %70 : vector<16x400xf32> to vector<16x400xbf16>
    %c0_10 = arith.constant 0 : index
    %c0_11 = arith.constant 0 : index
    %72 = vector.load %arg6[%c0_10, %c0_11] : memref<400x400xbf16, #tpu.memory_space<vmem>>, vector<400x400xbf16>
    %cst_12 = arith.constant dense<0.000000e+00> : vector<16x400xf32>
    %73 = tpu.matmul %71, %72, %cst_12 {dimension_numbers = #tpu.dot_dimension_numbers<[1], [0], [0], [1], [0, 0, 1, 1], [], []>} : vector<16x400xbf16>, vector<400x400xbf16>, vector<16x400xf32> -> vector<16x400xf32>
    %c0_13 = arith.constant 0 : index
    %c0_14 = arith.constant 0 : index
    %74 = vector.load %arg7[%c0_13, %c0_14] : memref<1x400xf32, #tpu.memory_space<vmem>>, vector<1x400xf32>
    %75 = vector.broadcast %74 : vector<1x400xf32> to vector<16x400xf32>
    %76 = arith.addf %73, %75 : vector<16x400xf32>
    %cst_15 = arith.constant 0.000000e+00 : f32
    %77 = vector.broadcast %cst_15 : f32 to vector<16x400xf32>
    %78 = arith.maximumf %76, %77 : vector<16x400xf32>
    %79 = arith.truncf %78 : vector<16x400xf32> to vector<16x400xbf16>
    %c0_16 = arith.constant 0 : index
    %c0_17 = arith.constant 0 : index
    %80 = vector.load %arg8[%c0_16, %c0_17] : memref<400x128xbf16, #tpu.memory_space<vmem>>, vector<400x128xbf16>
    %cst_18 = arith.constant dense<0.000000e+00> : vector<16x128xf32>
    %81 = tpu.matmul %79, %80, %cst_18 {dimension_numbers = #tpu.dot_dimension_numbers<[1], [0], [0], [1], [0, 0, 1, 1], [], []>} : vector<16x400xbf16>, vector<400x128xbf16>, vector<16x128xf32> -> vector<16x128xf32>
    %c0_19 = arith.constant 0 : index
    %c0_20 = arith.constant 0 : index
    %82 = vector.load %arg9[%c0_19, %c0_20] : memref<1x128xf32, #tpu.memory_space<vmem>>, vector<1x128xf32>
    %83 = vector.broadcast %82 : vector<1x128xf32> to vector<16x128xf32>
    %84 = arith.addf %81, %83 : vector<16x128xf32>
    %c0_21 = arith.constant 0 : index
    %c0_22 = arith.constant 0 : index
    %85 = vector.load %arg10[%c0_21, %c0_22] : memref<16x128xf32, #tpu.memory_space<vmem>>, vector<16x128xf32>
    tpu.vector_store %arg10[%c0_21, %c0_22], %84 {strides = array<i32>} : memref<16x128xf32, #tpu.memory_space<vmem>>, vector<16x128xf32>,
    return
  }
  func.func @transform_0(%arg0: i32) -> (i32, i32) {
    %c0_i32 = arith.constant 0 : i32
    %c0_i32_0 = arith.constant 0 : i32
    return %arg0, %c0_i32 : i32, i32
  }
  func.func @transform_1(%arg0: i32) -> (i32, i32) {
    %c0_i32 = arith.constant 0 : i32
    %c0_i32_0 = arith.constant 0 : i32
    return %arg0, %c0_i32 : i32, i32
  }
  func.func @transform_2(%arg0: i32) -> (i32, i32) {
    %c0_i32 = arith.constant 0 : i32
    %c0_i32_0 = arith.constant 0 : i32
    %c0_i32_1 = arith.constant 0 : i32
    return %c0_i32, %c0_i32_0 : i32, i32
  }
  func.func @transform_3(%arg0: i32) -> (i32, i32) {
    %c0_i32 = arith.constant 0 : i32
    %c0_i32_0 = arith.constant 0 : i32
    %c0_i32_1 = arith.constant 0 : i32
    return %c0_i32, %c0_i32_0 : i32, i32
  }
  func.func @transform_4(%arg0: i32) -> (i32, i32) {
    %c0_i32 = arith.constant 0 : i32
    %c0_i32_0 = arith.constant 0 : i32
    %c0_i32_1 = arith.constant 0 : i32
    return %c0_i32, %c0_i32_0 : i32, i32
  }
  func.func @transform_5(%arg0: i32) -> (i32, i32) {
    %c0_i32 = arith.constant 0 : i32
    %c0_i32_0 = arith.constant 0 : i32
    %c0_i32_1 = arith.constant 0 : i32
    return %c0_i32, %c0_i32_0 : i32, i32
  }
  func.func @transform_6(%arg0: i32) -> (i32, i32) {
    %c0_i32 = arith.constant 0 : i32
    %c0_i32_0 = arith.constant 0 : i32
    %c0_i32_1 = arith.constant 0 : i32
    return %c0_i32, %c0_i32_0 : i32, i32
  }
  func.func @transform_7(%arg0: i32) -> (i32, i32) {
    %c0_i32 = arith.constant 0 : i32
    %c0_i32_0 = arith.constant 0 : i32
    %c0_i32_1 = arith.constant 0 : i32
    return %c0_i32, %c0_i32_0 : i32, i32
  }
  func.func @transform_8(%arg0: i32) -> (i32, i32) {
    %c0_i32 = arith.constant 0 : i32
    %c0_i32_0 = arith.constant 0 : i32
    %c0_i32_1 = arith.constant 0 : i32
    return %c0_i32, %c0_i32_0 : i32, i32
  }
  func.func @transform_9(%arg0: i32) -> (i32, i32) {
    %c0_i32 = arith.constant 0 : i32
    %c0_i32_0 = arith.constant 0 : i32
    return %arg0, %c0_i32 : i32, i32
  }
}

</mosaic_0001>

<llo_original>
// kernel: encoder_forward.1
$region0: #{encoder_forward.1}
  #allocation0 [shape = 'u32[]', space=smem, size = 0x4, offset = 0x4, fixed_abs, tag = 'smem constant byte address 0x4 - core index']
  #allocation1 [shape = 'u32[144,128]{1,0:T(1,128)}', space=vmem, size = 0x12000, scoped, tag = 'internal scratch']
  %s0 = inlined_call_operand.vmem [shape: f32[16,784], index: 0, kind: input, shape index: {}]
  %s1 = inlined_call_operand.vmem [shape: f32[16,10], index: 1, kind: input, shape index: {}]
  %s2 = inlined_call_operand.vmem [shape: bf16[784,400], index: 2, kind: input, shape index: {}]
  %s3 = inlined_call_operand.vmem [shape: f32[10,400], index: 3, kind: input, shape index: {}]
  %s4 = inlined_call_operand.vmem [shape: f32[1,400], index: 4, kind: input, shape index: {}]
  %s5 = inlined_call_operand.vmem [shape: bf16[400,400], index: 5, kind: input, shape index: {}]
  %s6 = inlined_call_operand.vmem [shape: f32[1,400], index: 6, kind: input, shape index: {}]
  %s7 = inlined_call_operand.vmem [shape: bf16[400,128], index: 7, kind: input, shape index: {}]
  %s8 = inlined_call_operand.vmem [shape: f32[1,128], index: 8, kind: input, shape index: {}]
  %s9 = inlined_call_operand.vmem [shape: f32[16,128], index: 9, kind: output, shape index: {}]
  %s10 = sld [smem:[#allocation0]]
  $region46: #{encoder_forward.1} parent=0
    _
  %s12 = ssub.s32 1, %s10
  %s13 = scalar_select 0, %s12, %s10
  // Predicated region
  $region2: #{encoder_forward.1} parent=0 // pred_check
    _
  $region3: #{encoder_forward.1} parent=0 // pred_check_branch
    %15 = sbr.rel (0) target = $region5
  $region4: #{encoder_forward.1} parent=0 // pred_region
    _
  $region5: #{encoder_forward.1} parent=0 // pred_fallthru
    _
  // Predicated region
  $region6: #{encoder_forward.1} parent=0 // pred_check
    _
  $region7: #{encoder_forward.1} parent=0 // pred_check_branch
    %17 = sbr.rel (0) target = $region9
  $region8: #{encoder_forward.1} parent=0 // pred_region
    _
  $region9: #{encoder_forward.1} parent=0 // pred_fallthru
    _
  // Predicated region
  $region10: #{encoder_forward.1} parent=0 // pred_check
    _
  $region11: #{encoder_forward.1} parent=0 // pred_check_branch
    %19 = sbr.rel (0) target = $region13
  $region12: #{encoder_forward.1} parent=0 // pred_region
    _
  $region13: #{encoder_forward.1} parent=0 // pred_fallthru
    _
  // Predicated region
  $region14: #{encoder_forward.1} parent=0 // pred_check
    _
  $region15: #{encoder_forward.1} parent=0 // pred_check_branch
    %21 = sbr.rel (0) target = $region17
  $region16: #{encoder_forward.1} parent=0 // pred_region
    _
  $region17: #{encoder_forward.1} parent=0 // pred_fallthru
    _
  // Predicated region
  $region18: #{encoder_forward.1} parent=0 // pred_check
    _
  $region19: #{encoder_forward.1} parent=0 // pred_check_branch
    %23 = sbr.rel (0) target = $region21
  $region20: #{encoder_forward.1} parent=0 // pred_region
    _
  $region21: #{encoder_forward.1} parent=0 // pred_fallthru
    _
  // Predicated region
  $region22: #{encoder_forward.1} parent=0 // pred_check
    _
  $region23: #{encoder_forward.1} parent=0 // pred_check_branch
    %25 = sbr.rel (0) target = $region25
  $region24: #{encoder_forward.1} parent=0 // pred_region
    _
  $region25: #{encoder_forward.1} parent=0 // pred_fallthru
    _
  // Predicated region
  $region26: #{encoder_forward.1} parent=0 // pred_check
    _
  $region27: #{encoder_forward.1} parent=0 // pred_check_branch
    %27 = sbr.rel (0) target = $region29
  $region28: #{encoder_forward.1} parent=0 // pred_region
    _
  $region29: #{encoder_forward.1} parent=0 // pred_fallthru
    _
  // Predicated region
  $region30: #{encoder_forward.1} parent=0 // pred_check
    _
  $region31: #{encoder_forward.1} parent=0 // pred_check_branch
    %29 = sbr.rel (0) target = $region33
  $region32: #{encoder_forward.1} parent=0 // pred_region
    _
  $region33: #{encoder_forward.1} parent=0 // pred_fallthru
    _
  // Predicated region
  $region34: #{encoder_forward.1} parent=0 // pred_check
    _
  $region35: #{encoder_forward.1} parent=0 // pred_check_branch
    %31 = sbr.rel (0) target = $region37
  $region36: #{encoder_forward.1} parent=0 // pred_region
    _
  $region37: #{encoder_forward.1} parent=0 // pred_fallthru
    _
  %v33 = vld [vmem:[%s0] sm:$0xff]
  %v34 = vld [vmem:[%s0 + $0x8] sm:$0xff]
  %v35 = vld [vmem:[%s0 + $0x10] sm:$0xff]
  %v36 = vld [vmem:[%s0 + $0x18] sm:$0xff]
  %v37 = vld [vmem:[%s0 + $0x20] sm:$0xff]
  %v38 = vld [vmem:[%s0 + $0x28] sm:$0xff]
  %v39 = vld [vmem:[%s0 + $0x30] sm:$0xff]
  %v40 = vld [vmem:[%s0 + $0x38] sm:$0xff]
  %v41 = vld [vmem:[%s0 + $0x40] sm:$0xff]
  %v42 = vld [vmem:[%s0 + $0x48] sm:$0xff]
  %v43 = vld [vmem:[%s0 + $0x50] sm:$0xff]
  %v44 = vld [vmem:[%s0 + $0x58] sm:$0xff]
  %v45 = vld [vmem:[%s0 + $0x60] sm:$0xff]
  %v46 = vld [vmem:[%s0 + $0x68] sm:$0xff]
  %v47 = vpack.c.bf16 %v40, %v33
  %v48 = vpack.c.bf16 %v41, %v34
  %v49 = vpack.c.bf16 %v42, %v35
  %v50 = vpack.c.bf16 %v43, %v36
  %v51 = vpack.c.bf16 %v44, %v37
  %v52 = vpack.c.bf16 %v45, %v38
  %v53 = vpack.c.bf16 %v46, %v39
  %v54 = vld [vmem:[%s2] sm:$0xff]
  %v55 = vld [vmem:[%s2 + $0x8] sm:$0xff]
  %v56 = vld [vmem:[%s2 + $0x10] sm:$0xff]
  %v57 = vld [vmem:[%s2 + $0x18] sm:$0xff]
  %v58 = vld [vmem:[%s2 + $0x20] sm:$0xff]
  %v59 = vld [vmem:[%s2 + $0x28] sm:$0xff]
  %v60 = vld [vmem:[%s2 + $0x30] sm:$0xff]
  %v61 = vld [vmem:[%s2 + $0x38] sm:$0xff]
  %v62 = vld [vmem:[%s2 + $0x40] sm:$0xff]
  %v63 = vld [vmem:[%s2 + $0x48] sm:$0xff]
  %v64 = vld [vmem:[%s2 + $0x50] sm:$0xff]
  %v65 = vld [vmem:[%s2 + $0x58] sm:$0xff]
  %v66 = vld [vmem:[%s2 + $0x60] sm:$0xff]
  %v67 = vld [vmem:[%s2 + $0x68] sm:$0xff]
  %v68 = vld [vmem:[%s2 + $0x70] sm:$0xff]
  %v69 = vld [vmem:[%s2 + $0x78] sm:$0xff]
  %v70 = vld [vmem:[%s2 + $0x80] sm:$0xff]
  %v71 = vld [vmem:[%s2 + $0x88] sm:$0xff]
  %v72 = vld [vmem:[%s2 + $0x90] sm:$0xff]
  %v73 = vld [vmem:[%s2 + $0x98] sm:$0xff]
  %v74 = vld [vmem:[%s2 + $0xa0] sm:$0xff]
  %v75 = vld [vmem:[%s2 + $0xa8] sm:$0xff]
  %v76 = vld [vmem:[%s2 + $0xb0] sm:$0xff]
  %v77 = vld [vmem:[%s2 + $0xb8] sm:$0xff]
  %v78 = vld [vmem:[%s2 + $0xc0] sm:$0xff]
  %v79 = vld [vmem:[%s2 + $0xc8] sm:$0xff]
  %v80 = vld [vmem:[%s2 + $0xd0] sm:$0xff]
  %v81 = vld [vmem:[%s2 + $0xd8] sm:$0xff]
  %v82 = vld [vmem:[%s2 + $0xe0] sm:$0xff]
  %v83 = vld [vmem:[%s2 + $0xe8] sm:$0xff]
  %v84 = vld [vmem:[%s2 + $0xf0] sm:$0xff]
  %v85 = vld [vmem:[%s2 + $0xf8] sm:$0xff]
  %v86 = vld [vmem:[%s2 + $0x100] sm:$0xff]
  %v87 = vld [vmem:[%s2 + $0x108] sm:$0xff]
  %v88 = vld [vmem:[%s2 + $0x110] sm:$0xff]
  %v89 = vld [vmem:[%s2 + $0x118] sm:$0xff]
  %v90 = vld [vmem:[%s2 + $0x120] sm:$0xff]
  %v91 = vld [vmem:[%s2 + $0x128] sm:$0xff]
  %v92 = vld [vmem:[%s2 + $0x130] sm:$0xff]
  %v93 = vld [vmem:[%s2 + $0x138] sm:$0xff]
  %v94 = vld [vmem:[%s2 + $0x140] sm:$0xff]
  %v95 = vld [vmem:[%s2 + $0x148] sm:$0xff]
  %v96 = vld [vmem:[%s2 + $0x150] sm:$0xff]
  %v97 = vld [vmem:[%s2 + $0x158] sm:$0xff]
  %v98 = vld [vmem:[%s2 + $0x160] sm:$0xff]
  %v99 = vld [vmem:[%s2 + $0x168] sm:$0xff]
  %v100 = vld [vmem:[%s2 + $0x170] sm:$0xff]
  %v101 = vld [vmem:[%s2 + $0x178] sm:$0xff]
  %v102 = vld [vmem:[%s2 + $0x180] sm:$0xff]
  %v103 = vld [vmem:[%s2 + $0x188] sm:$0xff]
  %v104 = vld [vmem:[%s2 + $0x190] sm:$0xff]
  %v105 = vld [vmem:[%s2 + $0x198] sm:$0xff]
  %v106 = vld [vmem:[%s2 + $0x1a0] sm:$0xff]
  %v107 = vld [vmem:[%s2 + $0x1a8] sm:$0xff]
  %v108 = vld [vmem:[%s2 + $0x1b0] sm:$0xff]
  %v109 = vld [vmem:[%s2 + $0x1b8] sm:$0xff]
  %v110 = vld [vmem:[%s2 + $0x1c0] sm:$0xff]
  %v111 = vld [vmem:[%s2 + $0x1c8] sm:$0xff]
  %v112 = vld [vmem:[%s2 + $0x1d0] sm:$0xff]
  %v113 = vld [vmem:[%s2 + $0x1d8] sm:$0xff]
  %v114 = vld [vmem:[%s2 + $0x1e0] sm:$0xff]
  %v115 = vld [vmem:[%s2 + $0x1e8] sm:$0xff]
  %v116 = vld [vmem:[%s2 + $0x1f0] sm:$0xff]
  %v117 = vld [vmem:[%s2 + $0x1f8] sm:$0xff]
  %v118 = vld [vmem:[%s2 + $0x200] sm:$0xff]
  %v119 = vld [vmem:[%s2 + $0x208] sm:$0xff]
  %v120 = vld [vmem:[%s2 + $0x210] sm:$0xff]
  %v121 = vld [vmem:[%s2 + $0x218] sm:$0xff]
  %v122 = vld [vmem:[%s2 + $0x220] sm:$0xff]
  %v123 = vld [vmem:[%s2 + $0x228] sm:$0xff]
  %v124 = vld [vmem:[%s2 + $0x230] sm:$0xff]
  %v125 = vld [vmem:[%s2 + $0x238] sm:$0xff]
  %v126 = vld [vmem:[%s2 + $0x240] sm:$0xff]
  %v127 = vld [vmem:[%s2 + $0x248] sm:$0xff]
  %v128 = vld [vmem:[%s2 + $0x250] sm:$0xff]
  %v129 = vld [vmem:[%s2 + $0x258] sm:$0xff]
  %v130 = vld [vmem:[%s2 + $0x260] sm:$0xff]
  %v131 = vld [vmem:[%s2 + $0x268] sm:$0xff]
  %v132 = vld [vmem:[%s2 + $0x270] sm:$0xff]
  %v133 = vld [vmem:[%s2 + $0x278] sm:$0xff]
  %v134 = vld [vmem:[%s2 + $0x280] sm:$0xff]
  %v135 = vld [vmem:[%s2 + $0x288] sm:$0xff]
  %v136 = vld [vmem:[%s2 + $0x290] sm:$0xff]
  %v137 = vld [vmem:[%s2 + $0x298] sm:$0xff]
  %v138 = vld [vmem:[%s2 + $0x2a0] sm:$0xff]
  %v139 = vld [vmem:[%s2 + $0x2a8] sm:$0xff]
  %v140 = vld [vmem:[%s2 + $0x2b0] sm:$0xff]
  %v141 = vld [vmem:[%s2 + $0x2b8] sm:$0xff]
  %v142 = vld [vmem:[%s2 + $0x2c0] sm:$0xff]
  %v143 = vld [vmem:[%s2 + $0x2c8] sm:$0xff]
  %v144 = vld [vmem:[%s2 + $0x2d0] sm:$0xff]
  %v145 = vld [vmem:[%s2 + $0x2d8] sm:$0xff]
  %v146 = vld [vmem:[%s2 + $0x2e0] sm:$0xff]
  %v147 = vld [vmem:[%s2 + $0x2e8] sm:$0xff]
  %v148 = vld [vmem:[%s2 + $0x2f0] sm:$0xff]
  %v149 = vld [vmem:[%s2 + $0x2f8] sm:$0xff]
  %v150 = vld [vmem:[%s2 + $0x300] sm:$0xff]
  %v151 = vld [vmem:[%s2 + $0x308] sm:$0xff]
  %v152 = vld [vmem:[%s2 + $0x310] sm:$0xff]
  %v153 = vld [vmem:[%s2 + $0x318] sm:$0xff]
  %v154 = vld [vmem:[%s2 + $0x320] sm:$0xff]
  %v155 = vld [vmem:[%s2 + $0x328] sm:$0xff]
  %v156 = vld [vmem:[%s2 + $0x330] sm:$0xff]
  %v157 = vld [vmem:[%s2 + $0x338] sm:$0xff]
  %v158 = vld [vmem:[%s2 + $0x340] sm:$0xff]
  %v159 = vld [vmem:[%s2 + $0x348] sm:$0xff]
  %v160 = vld [vmem:[%s2 + $0x350] sm:$0xff]
  %v161 = vld [vmem:[%s2 + $0x358] sm:$0xff]
  %v162 = vld [vmem:[%s2 + $0x360] sm:$0xff]
  %v163 = vld [vmem:[%s2 + $0x368] sm:$0xff]
  %v164 = vld [vmem:[%s2 + $0x370] sm:$0xff]
  %v165 = vld [vmem:[%s2 + $0x378] sm:$0xff]
  %v166 = vld [vmem:[%s2 + $0x380] sm:$0xff]
  %v167 = vld [vmem:[%s2 + $0x388] sm:$0xff]
  %v168 = vld [vmem:[%s2 + $0x390] sm:$0xff]
  %v169 = vld [vmem:[%s2 + $0x398] sm:$0xff]
  %v170 = vld [vmem:[%s2 + $0x3a0] sm:$0xff]
  %v171 = vld [vmem:[%s2 + $0x3a8] sm:$0xff]
  %v172 = vld [vmem:[%s2 + $0x3b0] sm:$0xff]
  %v173 = vld [vmem:[%s2 + $0x3b8] sm:$0xff]
  %v174 = vld [vmem:[%s2 + $0x3c0] sm:$0xff]
  %v175 = vld [vmem:[%s2 + $0x3c8] sm:$0xff]
  %v176 = vld [vmem:[%s2 + $0x3d0] sm:$0xff]
  %v177 = vld [vmem:[%s2 + $0x3d8] sm:$0xff]
  %v178 = vld [vmem:[%s2 + $0x3e0] sm:$0xff]
  %v179 = vld [vmem:[%s2 + $0x3e8] sm:$0xff]
  %v180 = vld [vmem:[%s2 + $0x3f0] sm:$0xff]
  %v181 = vld [vmem:[%s2 + $0x3f8] sm:$0xff]
  %v182 = vld [vmem:[%s2 + $0x400] sm:$0xff]
  %v183 = vld [vmem:[%s2 + $0x408] sm:$0xff]
  %v184 = vld [vmem:[%s2 + $0x410] sm:$0xff]
  %v185 = vld [vmem:[%s2 + $0x418] sm:$0xff]
  %v186 = vld [vmem:[%s2 + $0x420] sm:$0xff]
  %v187 = vld [vmem:[%s2 + $0x428] sm:$0xff]
  %v188 = vld [vmem:[%s2 + $0x430] sm:$0xff]
  %v189 = vld [vmem:[%s2 + $0x438] sm:$0xff]
  %v190 = vld [vmem:[%s2 + $0x440] sm:$0xff]
  %v191 = vld [vmem:[%s2 + $0x448] sm:$0xff]
  %v192 = vld [vmem:[%s2 + $0x450] sm:$0xff]
  %v193 = vld [vmem:[%s2 + $0x458] sm:$0xff]
  %v194 = vld [vmem:[%s2 + $0x460] sm:$0xff]
  %v195 = vld [vmem:[%s2 + $0x468] sm:$0xff]
  %v196 = vld [vmem:[%s2 + $0x470] sm:$0xff]
  %v197 = vld [vmem:[%s2 + $0x478] sm:$0xff]
  %v198 = vld [vmem:[%s2 + $0x480] sm:$0xff]
  %v199 = vld [vmem:[%s2 + $0x488] sm:$0xff]
  %v200 = vld [vmem:[%s2 + $0x490] sm:$0xff]
  %v201 = vld [vmem:[%s2 + $0x498] sm:$0xff]
  %v202 = vld [vmem:[%s2 + $0x4a0] sm:$0xff]
  %v203 = vld [vmem:[%s2 + $0x4a8] sm:$0xff]
  %v204 = vld [vmem:[%s2 + $0x4b0] sm:$0xff]
  %v205 = vld [vmem:[%s2 + $0x4b8] sm:$0xff]
  %v206 = vld [vmem:[%s2 + $0x4c0] sm:$0xff]
  %v207 = vld [vmem:[%s2 + $0x4c8] sm:$0xff]
  %v208 = vld [vmem:[%s2 + $0x4d0] sm:$0xff]
  %v209 = vld [vmem:[%s2 + $0x4d8] sm:$0xff]
  %v210 = vld [vmem:[%s2 + $0x4e0] sm:$0xff]
  %v211 = vld [vmem:[%s2 + $0x4e8] sm:$0xff]
  %v212 = vld [vmem:[%s2 + $0x4f0] sm:$0xff]
  %v213 = vld [vmem:[%s2 + $0x4f8] sm:$0xff]
  %v214 = vld [vmem:[%s2 + $0x500] sm:$0xff]
  %v215 = vld [vmem:[%s2 + $0x508] sm:$0xff]
  %v216 = vld [vmem:[%s2 + $0x510] sm:$0xff]
  %v217 = vld [vmem:[%s2 + $0x518] sm:$0xff]
  %v218 = vld [vmem:[%s2 + $0x520] sm:$0xff]
  %v219 = vld [vmem:[%s2 + $0x528] sm:$0xff]
  %v220 = vld [vmem:[%s2 + $0x530] sm:$0xff]
  %v221 = vld [vmem:[%s2 + $0x538] sm:$0xff]
  %v222 = vld [vmem:[%s2 + $0x540] sm:$0xff]
  %v223 = vld [vmem:[%s2 + $0x548] sm:$0xff]
  %v224 = vld [vmem:[%s2 + $0x550] sm:$0xff]
  %v225 = vld [vmem:[%s2 + $0x558] sm:$0xff]
  %v226 = vld [vmem:[%s2 + $0x560] sm:$0xff]
  %v227 = vld [vmem:[%s2 + $0x568] sm:$0xff]
  %v228 = vld [vmem:[%s2 + $0x570] sm:$0xff]
  %v229 = vld [vmem:[%s2 + $0x578] sm:$0xff]
  %v230 = vld [vmem:[%s2 + $0x580] sm:$0xff]
  %v231 = vld [vmem:[%s2 + $0x588] sm:$0xff]
  %v232 = vld [vmem:[%s2 + $0x590] sm:$0xff]
  %v233 = vld [vmem:[%s2 + $0x598] sm:$0xff]
  %v234 = vld [vmem:[%s2 + $0x5a0] sm:$0xff]
  %v235 = vld [vmem:[%s2 + $0x5a8] sm:$0xff]
  %v236 = vld [vmem:[%s2 + $0x5b0] sm:$0xff]
  %v237 = vld [vmem:[%s2 + $0x5b8] sm:$0xff]
  %v238 = vld [vmem:[%s2 + $0x5c0] sm:$0xff]
  %v239 = vld [vmem:[%s2 + $0x5c8] sm:$0xff]
  %v240 = vld [vmem:[%s2 + $0x5d0] sm:$0xff]
  %v241 = vld [vmem:[%s2 + $0x5d8] sm:$0xff]
  %v242 = vld [vmem:[%s2 + $0x5e0] sm:$0xff]
  %v243 = vld [vmem:[%s2 + $0x5e8] sm:$0xff]
  %v244 = vld [vmem:[%s2 + $0x5f0] sm:$0xff]
  %v245 = vld [vmem:[%s2 + $0x5f8] sm:$0xff]
  %v246 = vld [vmem:[%s2 + $0x600] sm:$0xff]
  %v247 = vld [vmem:[%s2 + $0x608] sm:$0xff]
  %v248 = vld [vmem:[%s2 + $0x610] sm:$0xff]
  %v249 = vld [vmem:[%s2 + $0x618] sm:$0xff]
  %v250 = vld [vmem:[%s4] sm:$0xf]
  %v252 = vlaneseq
  %v253 = vshrl.u32 %v252, 7
  %v254 = vsub.s32 0, %v253
  %v255 = vrot.slane %v250, %v254
  %v256 = vlaneseq
  %v257 = vshrl.u32 %v256, 7
  %v258 = vsub.s32 1, %v257
  %v259 = vrot.slane %v250, %v258
  %v260 = vlaneseq
  %v261 = vshrl.u32 %v260, 7
  %v262 = vsub.s32 2, %v261
  %v263 = vrot.slane %v250, %v262
  %v264 = vlaneseq
  %v265 = vshrl.u32 %v264, 7
  %v266 = vsub.s32 3, %v265
  %v267 = vrot.slane %v250, %v266
  %v468 = vunpack.c.l.b16 %v54
  %v469 = vunpack.c.h.b16 %v54
  %v470 = vunpack.c.l.b16 %v55
  %v471 = vunpack.c.h.b16 %v55
  %v472 = vunpack.c.l.b16 %v56
  %v473 = vunpack.c.h.b16 %v56
  %v474 = vunpack.c.l.b16 %v57
  %v475 = vunpack.c.h.b16 %v57
  %v476 = vunpack.c.l.b16 %v58
  %v477 = vunpack.c.h.b16 %v58
  %v478 = vunpack.c.l.b16 %v59
  %v479 = vunpack.c.h.b16 %v59
  %v480 = vunpack.c.l.b16 %v60
  %v481 = vunpack.c.h.b16 %v60
  %v482 = vunpack.c.l.b16 %v61
  %v483 = vunpack.c.h.b16 %v61
  %v484 = vunpack.c.l.b16 %v62
  %v485 = vunpack.c.h.b16 %v62
  %v486 = vunpack.c.l.b16 %v63
  %v487 = vunpack.c.h.b16 %v63
  %v488 = vunpack.c.l.b16 %v64
  %v489 = vunpack.c.h.b16 %v64
  %v490 = vunpack.c.l.b16 %v65
  %v491 = vunpack.c.h.b16 %v65
  %v492 = vunpack.c.l.b16 %v66
  %v493 = vunpack.c.h.b16 %v66
  %v494 = vunpack.c.l.b16 %v67
  %v495 = vunpack.c.h.b16 %v67
  %v496 = vunpack.c.l.b16 %v68
  %v497 = vunpack.c.h.b16 %v68
  %v498 = vunpack.c.l.b16 %v69
  %v499 = vunpack.c.h.b16 %v69
  %v500 = vunpack.c.l.b16 %v70
  %v501 = vunpack.c.h.b16 %v70
  %v502 = vunpack.c.l.b16 %v71
  %v503 = vunpack.c.h.b16 %v71
  %v504 = vunpack.c.l.b16 %v72
  %v505 = vunpack.c.h.b16 %v72
  %v506 = vunpack.c.l.b16 %v73
  %v507 = vunpack.c.h.b16 %v73
  %v508 = vunpack.c.l.b16 %v74
  %v509 = vunpack.c.h.b16 %v74
  %v510 = vunpack.c.l.b16 %v75
  %v511 = vunpack.c.h.b16 %v75
  %v512 = vunpack.c.l.b16 %v76
  %v513 = vunpack.c.h.b16 %v76
  %v514 = vunpack.c.l.b16 %v77
  %v515 = vunpack.c.h.b16 %v77
  %v516 = vunpack.c.l.b16 %v78
  %v517 = vunpack.c.h.b16 %v78
  %v518 = vunpack.c.l.b16 %v79
  %v519 = vunpack.c.h.b16 %v79
  %v520 = vunpack.c.l.b16 %v80
  %v521 = vunpack.c.h.b16 %v80
  %v522 = vunpack.c.l.b16 %v81
  %v523 = vunpack.c.h.b16 %v81
  %v524 = vunpack.c.l.b16 %v82
  %v525 = vunpack.c.h.b16 %v82
  %v526 = vunpack.c.l.b16 %v83
  %v527 = vunpack.c.h.b16 %v83
  %v528 = vunpack.c.l.b16 %v84
  %v529 = vunpack.c.h.b16 %v84
  %v530 = vunpack.c.l.b16 %v85
  %v531 = vunpack.c.h.b16 %v85
  %v532 = vunpack.c.l.b16 %v86
  %v533 = vunpack.c.h.b16 %v86
  %v534 = vunpack.c.l.b16 %v87
  %v535 = vunpack.c.h.b16 %v87
  %v536 = vunpack.c.l.b16 %v88
  %v537 = vunpack.c.h.b16 %v88
  %v538 = vunpack.c.l.b16 %v89
  %v539 = vunpack.c.h.b16 %v89
  %v540 = vunpack.c.l.b16 %v90
  %v541 = vunpack.c.h.b16 %v90
  %v542 = vunpack.c.l.b16 %v91
  %v543 = vunpack.c.h.b16 %v91
  %v544 = vunpack.c.l.b16 %v92
  %v545 = vunpack.c.h.b16 %v92
  %v546 = vunpack.c.l.b16 %v93
  %v547 = vunpack.c.h.b16 %v93
  %v548 = vunpack.c.l.b16 %v94
  %v549 = vunpack.c.h.b16 %v94
  %v550 = vunpack.c.l.b16 %v95
  %v551 = vunpack.c.h.b16 %v95
  %v552 = vunpack.c.l.b16 %v96
  %v553 = vunpack.c.h.b16 %v96
  %v554 = vunpack.c.l.b16 %v97
  %v555 = vunpack.c.h.b16 %v97
  %v556 = vunpack.c.l.b16 %v98
  %v557 = vunpack.c.h.b16 %v98
  %v558 = vunpack.c.l.b16 %v99
  %v559 = vunpack.c.h.b16 %v99
  %v560 = vunpack.c.l.b16 %v100
  %v561 = vunpack.c.h.b16 %v100
  %v562 = vunpack.c.l.b16 %v101
  %v563 = vunpack.c.h.b16 %v101
  %v564 = vunpack.c.l.b16 %v102
  %v565 = vunpack.c.h.b16 %v102
  %v566 = vunpack.c.l.b16 %v103
  %v567 = vunpack.c.h.b16 %v103
  %v568 = vunpack.c.l.b16 %v104
  %v569 = vunpack.c.h.b16 %v104
  %v570 = vunpack.c.l.b16 %v105
  %v571 = vunpack.c.h.b16 %v105
  %v572 = vunpack.c.l.b16 %v106
  %v573 = vunpack.c.h.b16 %v106
  %v574 = vunpack.c.l.b16 %v107
  %v575 = vunpack.c.h.b16 %v107
  %v576 = vunpack.c.l.b16 %v108
  %v577 = vunpack.c.h.b16 %v108
  %v578 = vunpack.c.l.b16 %v109
  %v579 = vunpack.c.h.b16 %v109
  %v580 = vunpack.c.l.b16 %v110
  %v581 = vunpack.c.h.b16 %v110
  %v582 = vunpack.c.l.b16 %v111
  %v583 = vunpack.c.h.b16 %v111
  %v584 = vunpack.c.l.b16 %v112
  %v585 = vunpack.c.h.b16 %v112
  %v586 = vunpack.c.l.b16 %v113
  %v587 = vunpack.c.h.b16 %v113
  %v588 = vunpack.c.l.b16 %v114
  %v589 = vunpack.c.h.b16 %v114
  %v590 = vunpack.c.l.b16 %v115
  %v591 = vunpack.c.h.b16 %v115
  %v592 = vunpack.c.l.b16 %v116
  %v593 = vunpack.c.h.b16 %v116
  %v594 = vunpack.c.l.b16 %v117
  %v595 = vunpack.c.h.b16 %v117
  %v596 = vunpack.c.l.b16 %v118
  %v597 = vunpack.c.h.b16 %v118
  %v598 = vunpack.c.l.b16 %v119
  %v599 = vunpack.c.h.b16 %v119
  %v600 = vunpack.c.l.b16 %v120
  %v601 = vunpack.c.h.b16 %v120
  %v602 = vunpack.c.l.b16 %v121
  %v603 = vunpack.c.h.b16 %v121
  %v604 = vunpack.c.l.b16 %v122
  %v605 = vunpack.c.h.b16 %v122
  %v606 = vunpack.c.l.b16 %v123
  %v607 = vunpack.c.h.b16 %v123
  %v608 = vunpack.c.l.b16 %v124
  %v609 = vunpack.c.h.b16 %v124
  %v610 = vunpack.c.l.b16 %v125
  %v611 = vunpack.c.h.b16 %v125
  %v612 = vunpack.c.l.b16 %v126
  %v613 = vunpack.c.h.b16 %v126
  %v614 = vunpack.c.l.b16 %v127
  %v615 = vunpack.c.h.b16 %v127
  %v616 = vunpack.c.l.b16 %v128
  %v617 = vunpack.c.h.b16 %v128
  %v618 = vunpack.c.l.b16 %v129
  %v619 = vunpack.c.h.b16 %v129
  %v620 = vunpack.c.l.b16 %v130
  %v621 = vunpack.c.h.b16 %v130
  %v622 = vunpack.c.l.b16 %v131
  %v623 = vunpack.c.h.b16 %v131
  %v624 = vunpack.c.l.b16 %v132
  %v625 = vunpack.c.h.b16 %v132
  %v626 = vunpack.c.l.b16 %v133
  %v627 = vunpack.c.h.b16 %v133
  %v628 = vunpack.c.l.b16 %v134
  %v629 = vunpack.c.h.b16 %v134
  %v630 = vunpack.c.l.b16 %v135
  %v631 = vunpack.c.h.b16 %v135
  %v632 = vunpack.c.l.b16 %v136
  %v633 = vunpack.c.h.b16 %v136
  %v634 = vunpack.c.l.b16 %v137
  %v635 = vunpack.c.h.b16 %v137
  %v636 = vunpack.c.l.b16 %v138
  %v637 = vunpack.c.h.b16 %v138
  %v638 = vunpack.c.l.b16 %v139
  %v639 = vunpack.c.h.b16 %v139
  %v640 = vunpack.c.l.b16 %v140
  %v641 = vunpack.c.h.b16 %v140
  %v642 = vunpack.c.l.b16 %v141
  %v643 = vunpack.c.h.b16 %v141
  %v644 = vunpack.c.l.b16 %v142
  %v645 = vunpack.c.h.b16 %v142
  %v646 = vunpack.c.l.b16 %v143
  %v647 = vunpack.c.h.b16 %v143
  %v648 = vunpack.c.l.b16 %v144
  %v649 = vunpack.c.h.b16 %v144
  %v650 = vunpack.c.l.b16 %v145
  %v651 = vunpack.c.h.b16 %v145
  %v652 = vunpack.c.l.b16 %v146
  %v653 = vunpack.c.h.b16 %v146
  %v654 = vunpack.c.l.b16 %v147
  %v655 = vunpack.c.h.b16 %v147
  %v656 = vunpack.c.l.b16 %v148
  %v657 = vunpack.c.h.b16 %v148
  %v658 = vunpack.c.l.b16 %v149
  %v659 = vunpack.c.h.b16 %v149
  %v660 = vunpack.c.l.b16 %v150
  %v661 = vunpack.c.h.b16 %v150
  %v662 = vunpack.c.l.b16 %v151
  %v663 = vunpack.c.h.b16 %v151
  %v664 = vunpack.c.l.b16 %v152
  %v665 = vunpack.c.h.b16 %v152
  %v666 = vunpack.c.l.b16 %v153
  %v667 = vunpack.c.h.b16 %v153
  %v668 = vunpack.c.l.b16 %v154
  %v669 = vunpack.c.h.b16 %v154
  %v670 = vunpack.c.l.b16 %v155
  %v671 = vunpack.c.h.b16 %v155
  %v672 = vunpack.c.l.b16 %v156
  %v673 = vunpack.c.h.b16 %v156
  %v674 = vunpack.c.l.b16 %v157
  %v675 = vunpack.c.h.b16 %v157
  %v676 = vunpack.c.l.b16 %v158
  %v677 = vunpack.c.h.b16 %v158
  %v678 = vunpack.c.l.b16 %v159
  %v679 = vunpack.c.h.b16 %v159
  %v680 = vunpack.c.l.b16 %v160
  %v681 = vunpack.c.h.b16 %v160
  %v682 = vunpack.c.l.b16 %v161
  %v683 = vunpack.c.h.b16 %v161
  %v684 = vunpack.c.l.b16 %v162
  %v685 = vunpack.c.h.b16 %v162
  %v686 = vunpack.c.l.b16 %v163
  %v687 = vunpack.c.h.b16 %v163
  %v688 = vunpack.c.l.b16 %v164
  %v689 = vunpack.c.h.b16 %v164
  %v690 = vunpack.c.l.b16 %v165
  %v691 = vunpack.c.h.b16 %v165
  %v692 = vunpack.c.l.b16 %v166
  %v693 = vunpack.c.h.b16 %v166
  %v694 = vunpack.c.l.b16 %v167
  %v695 = vunpack.c.h.b16 %v167
  %v696 = vunpack.c.l.b16 %v168
  %v697 = vunpack.c.h.b16 %v168
  %v698 = vunpack.c.l.b16 %v169
  %v699 = vunpack.c.h.b16 %v169
  %v700 = vunpack.c.l.b16 %v170
  %v701 = vunpack.c.h.b16 %v170
  %v702 = vunpack.c.l.b16 %v171
  %v703 = vunpack.c.h.b16 %v171
  %v704 = vunpack.c.l.b16 %v172
  %v705 = vunpack.c.h.b16 %v172
  %v706 = vunpack.c.l.b16 %v173
  %v707 = vunpack.c.h.b16 %v173
  %v708 = vunpack.c.l.b16 %v174
  %v709 = vunpack.c.h.b16 %v174
  %v710 = vunpack.c.l.b16 %v175
  %v711 = vunpack.c.h.b16 %v175
  %v712 = vunpack.c.l.b16 %v176
  %v713 = vunpack.c.h.b16 %v176
  %v714 = vunpack.c.l.b16 %v177
  %v715 = vunpack.c.h.b16 %v177
  %v716 = vunpack.c.l.b16 %v178
  %v717 = vunpack.c.h.b16 %v178
  %v718 = vunpack.c.l.b16 %v179
  %v719 = vunpack.c.h.b16 %v179
  %v720 = vunpack.c.l.b16 %v180
  %v721 = vunpack.c.h.b16 %v180
  %v722 = vunpack.c.l.b16 %v181
  %v723 = vunpack.c.h.b16 %v181
  %v724 = vunpack.c.l.b16 %v182
  %v725 = vunpack.c.h.b16 %v182
  %v726 = vunpack.c.l.b16 %v183
  %v727 = vunpack.c.h.b16 %v183
  %v728 = vunpack.c.l.b16 %v184
  %v729 = vunpack.c.h.b16 %v184
  %v730 = vunpack.c.l.b16 %v185
  %v731 = vunpack.c.h.b16 %v185
  %v732 = vunpack.c.l.b16 %v186
  %v733 = vunpack.c.h.b16 %v186
  %v734 = vunpack.c.l.b16 %v187
  %v735 = vunpack.c.h.b16 %v187
  %v736 = vunpack.c.l.b16 %v188
  %v737 = vunpack.c.h.b16 %v188
  %v738 = vunpack.c.l.b16 %v189
  %v739 = vunpack.c.h.b16 %v189
  %v740 = vunpack.c.l.b16 %v190
  %v741 = vunpack.c.h.b16 %v190
  %v742 = vunpack.c.l.b16 %v191
  %v743 = vunpack.c.h.b16 %v191
  %v744 = vunpack.c.l.b16 %v192
  %v745 = vunpack.c.h.b16 %v192
  %v746 = vunpack.c.l.b16 %v193
  %v747 = vunpack.c.h.b16 %v193
  %v748 = vunpack.c.l.b16 %v194
  %v749 = vunpack.c.h.b16 %v194
  %v750 = vunpack.c.l.b16 %v195
  %v751 = vunpack.c.h.b16 %v195
  %v752 = vunpack.c.l.b16 %v196
  %v753 = vunpack.c.h.b16 %v196
  %v754 = vunpack.c.l.b16 %v197
  %v755 = vunpack.c.h.b16 %v197
  %v756 = vunpack.c.l.b16 %v198
  %v757 = vunpack.c.h.b16 %v198
  %v758 = vunpack.c.l.b16 %v199
  %v759 = vunpack.c.h.b16 %v199
  %v760 = vunpack.c.l.b16 %v200
  %v761 = vunpack.c.h.b16 %v200
  %v762 = vunpack.c.l.b16 %v201
  %v763 = vunpack.c.h.b16 %v201
  %v764 = vunpack.c.l.b16 %v202
  %v765 = vunpack.c.h.b16 %v202
  %v766 = vunpack.c.l.b16 %v203
  %v767 = vunpack.c.h.b16 %v203
  %v768 = vunpack.c.l.b16 %v204
  %v769 = vunpack.c.h.b16 %v204
  %v770 = vunpack.c.l.b16 %v205
  %v771 = vunpack.c.h.b16 %v205
  %v772 = vunpack.c.l.b16 %v206
  %v773 = vunpack.c.h.b16 %v206
  %v774 = vunpack.c.l.b16 %v207
  %v775 = vunpack.c.h.b16 %v207
  %v776 = vunpack.c.l.b16 %v208
  %v777 = vunpack.c.h.b16 %v208
  %v778 = vunpack.c.l.b16 %v209
  %v779 = vunpack.c.h.b16 %v209
  %v780 = vunpack.c.l.b16 %v210
  %v781 = vunpack.c.h.b16 %v210
  %v782 = vunpack.c.l.b16 %v211
  %v783 = vunpack.c.h.b16 %v211
  %v784 = vunpack.c.l.b16 %v212
  %v785 = vunpack.c.h.b16 %v212
  %v786 = vunpack.c.l.b16 %v213
  %v787 = vunpack.c.h.b16 %v213
  %v788 = vunpack.c.l.b16 %v214
  %v789 = vunpack.c.h.b16 %v214
  %v790 = vunpack.c.l.b16 %v215
  %v791 = vunpack.c.h.b16 %v215
  %v792 = vunpack.c.l.b16 %v216
  %v793 = vunpack.c.h.b16 %v216
  %v794 = vunpack.c.l.b16 %v217
  %v795 = vunpack.c.h.b16 %v217
  %v796 = vunpack.c.l.b16 %v218
  %v797 = vunpack.c.h.b16 %v218
  %v798 = vunpack.c.l.b16 %v219
  %v799 = vunpack.c.h.b16 %v219
  %v800 = vunpack.c.l.b16 %v220
  %v801 = vunpack.c.h.b16 %v220
  %v802 = vunpack.c.l.b16 %v221
  %v803 = vunpack.c.h.b16 %v221
  %v804 = vunpack.c.l.b16 %v222
  %v805 = vunpack.c.h.b16 %v222
  %v806 = vunpack.c.l.b16 %v223
  %v807 = vunpack.c.h.b16 %v223
  %v808 = vunpack.c.l.b16 %v224
  %v809 = vunpack.c.h.b16 %v224
  %v810 = vunpack.c.l.b16 %v225
  %v811 = vunpack.c.h.b16 %v225
  %v812 = vunpack.c.l.b16 %v226
  %v813 = vunpack.c.h.b16 %v226
  %v814 = vunpack.c.l.b16 %v227
  %v815 = vunpack.c.h.b16 %v227
  %v816 = vunpack.c.l.b16 %v228
  %v817 = vunpack.c.h.b16 %v228
  %v818 = vunpack.c.l.b16 %v229
  %v819 = vunpack.c.h.b16 %v229
  %v820 = vunpack.c.l.b16 %v230
  %v821 = vunpack.c.h.b16 %v230
  %v822 = vunpack.c.l.b16 %v231
  %v823 = vunpack.c.h.b16 %v231
  %v824 = vunpack.c.l.b16 %v232
  %v825 = vunpack.c.h.b16 %v232
  %v826 = vunpack.c.l.b16 %v233
  %v827 = vunpack.c.h.b16 %v233
  %v828 = vunpack.c.l.b16 %v234
  %v829 = vunpack.c.h.b16 %v234
  %v830 = vunpack.c.l.b16 %v235
  %v831 = vunpack.c.h.b16 %v235
  %v832 = vunpack.c.l.b16 %v236
  %v833 = vunpack.c.h.b16 %v236
  %v834 = vunpack.c.l.b16 %v237
  %v835 = vunpack.c.h.b16 %v237
  %v836 = vunpack.c.l.b16 %v238
  %v837 = vunpack.c.h.b16 %v238
  %v838 = vunpack.c.l.b16 %v239
  %v839 = vunpack.c.h.b16 %v239
  %v840 = vunpack.c.l.b16 %v240
  %v841 = vunpack.c.h.b16 %v240
  %v842 = vunpack.c.l.b16 %v241
  %v843 = vunpack.c.h.b16 %v241
  %v844 = vunpack.c.l.b16 %v242
  %v845 = vunpack.c.h.b16 %v242
  %v846 = vunpack.c.l.b16 %v243
  %v847 = vunpack.c.h.b16 %v243
  %v848 = vunpack.c.l.b16 %v244
  %v849 = vunpack.c.h.b16 %v244
  %v850 = vunpack.c.l.b16 %v245
  %v851 = vunpack.c.h.b16 %v245
  %v852 = vunpack.c.l.b16 %v246
  %v853 = vunpack.c.h.b16 %v246
  %v854 = vunpack.c.l.b16 %v247
  %v855 = vunpack.c.h.b16 %v247
  %v856 = vunpack.c.l.b16 %v248
  %v857 = vunpack.c.h.b16 %v248
  %v858 = vunpack.c.l.b16 %v249
  %v859 = vunpack.c.h.b16 %v249
  %v860 = vpack.c.b16 %v472, %v468
  %v861 = vpack.c.b16 %v473, %v469
  %v862 = vpack.c.b16 %v474, %v470
  %v863 = vpack.c.b16 %v475, %v471
  %v864 = vpack.c.b16 %v480, %v476
  %v865 = vpack.c.b16 %v481, %v477
  %v866 = vpack.c.b16 %v482, %v478
  %v867 = vpack.c.b16 %v483, %v479
  %v868 = vpack.c.b16 %v488, %v484
  %v869 = vpack.c.b16 %v489, %v485
  %v870 = vpack.c.b16 %v490, %v486
  %v871 = vpack.c.b16 %v491, %v487
  %v872 = vpack.c.b16 %v496, %v492
  %v873 = vpack.c.b16 %v497, %v493
  %v874 = vpack.c.b16 %v498, %v494
  %v875 = vpack.c.b16 %v499, %v495
  %v876 = vpack.c.b16 %v504, %v500
  %v877 = vpack.c.b16 %v505, %v501
  %v878 = vpack.c.b16 %v506, %v502
  %v879 = vpack.c.b16 %v507, %v503
  %v880 = vpack.c.b16 %v512, %v508
  %v881 = vpack.c.b16 %v513, %v509
  %v882 = vpack.c.b16 %v514, %v510
  %v883 = vpack.c.b16 %v515, %v511
  %v884 = vpack.c.b16 %v520, %v516
  %v885 = vpack.c.b16 %v521, %v517
  %v886 = vpack.c.b16 %v522, %v518
  %v887 = vpack.c.b16 %v523, %v519
  %v888 = vpack.c.b16 %v528, %v524
  %v889 = vpack.c.b16 %v529, %v525
  %v890 = vpack.c.b16 %v530, %v526
  %v891 = vpack.c.b16 %v531, %v527
  %v892 = vpack.c.b16 %v536, %v532
  %v893 = vpack.c.b16 %v537, %v533
  %v894 = vpack.c.b16 %v538, %v534
  %v895 = vpack.c.b16 %v539, %v535
  %v896 = vpack.c.b16 %v544, %v540
  %v897 = vpack.c.b16 %v545, %v541
  %v898 = vpack.c.b16 %v546, %v542
  %v899 = vpack.c.b16 %v547, %v543
  %v900 = vpack.c.b16 %v552, %v548
  %v901 = vpack.c.b16 %v553, %v549
  %v902 = vpack.c.b16 %v554, %v550
  %v903 = vpack.c.b16 %v555, %v551
  %v904 = vpack.c.b16 %v560, %v556
  %v905 = vpack.c.b16 %v561, %v557
  %v906 = vpack.c.b16 %v562, %v558
  %v907 = vpack.c.b16 %v563, %v559
  %v908 = vpack.c.b16 %v568, %v564
  %v909 = vpack.c.b16 %v569, %v565
  %v910 = vpack.c.b16 %v570, %v566
  %v911 = vpack.c.b16 %v571, %v567
  %v912 = vpack.c.b16 %v576, %v572
  %v913 = vpack.c.b16 %v577, %v573
  %v914 = vpack.c.b16 %v578, %v574
  %v915 = vpack.c.b16 %v579, %v575
  %v916 = vpack.c.b16 %v584, %v580
  %v917 = vpack.c.b16 %v585, %v581
  %v918 = vpack.c.b16 %v586, %v582
  %v919 = vpack.c.b16 %v587, %v583
  %v920 = vpack.c.b16 %v592, %v588
  %v921 = vpack.c.b16 %v593, %v589
  %v922 = vpack.c.b16 %v594, %v590
  %v923 = vpack.c.b16 %v595, %v591
  %v924 = vpack.c.b16 %v600, %v596
  %v925 = vpack.c.b16 %v601, %v597
  %v926 = vpack.c.b16 %v602, %v598
  %v927 = vpack.c.b16 %v603, %v599
  %v928 = vpack.c.b16 %v608, %v604
  %v929 = vpack.c.b16 %v609, %v605
  %v930 = vpack.c.b16 %v610, %v606
  %v931 = vpack.c.b16 %v611, %v607
  %v932 = vpack.c.b16 %v616, %v612
  %v933 = vpack.c.b16 %v617, %v613
  %v934 = vpack.c.b16 %v618, %v614
  %v935 = vpack.c.b16 %v619, %v615
  %v936 = vpack.c.b16 %v624, %v620
  %v937 = vpack.c.b16 %v625, %v621
  %v938 = vpack.c.b16 %v626, %v622
  %v939 = vpack.c.b16 %v627, %v623
  %v940 = vpack.c.b16 %v632, %v628
  %v941 = vpack.c.b16 %v633, %v629
  %v942 = vpack.c.b16 %v634, %v630
  %v943 = vpack.c.b16 %v635, %v631
  %v944 = vpack.c.b16 %v640, %v636
  %v945 = vpack.c.b16 %v641, %v637
  %v946 = vpack.c.b16 %v642, %v638
  %v947 = vpack.c.b16 %v643, %v639
  %v948 = vpack.c.b16 %v648, %v644
  %v949 = vpack.c.b16 %v649, %v645
  %v950 = vpack.c.b16 %v650, %v646
  %v951 = vpack.c.b16 %v651, %v647
  %v952 = vpack.c.b16 %v656, %v652
  %v953 = vpack.c.b16 %v657, %v653
  %v954 = vpack.c.b16 %v658, %v654
  %v955 = vpack.c.b16 %v659, %v655
  %v956 = vpack.c.b16 %v664, %v660
  %v957 = vpack.c.b16 %v665, %v661
  %v958 = vpack.c.b16 %v666, %v662
  %v959 = vpack.c.b16 %v667, %v663
  %v960 = vpack.c.b16 %v672, %v668
  %v961 = vpack.c.b16 %v673, %v669
  %v962 = vpack.c.b16 %v674, %v670
  %v963 = vpack.c.b16 %v675, %v671
  %v964 = vpack.c.b16 %v680, %v676
  %v965 = vpack.c.b16 %v681, %v677
  %v966 = vpack.c.b16 %v682, %v678
  %v967 = vpack.c.b16 %v683, %v679
  %v968 = vpack.c.b16 %v688, %v684
  %v969 = vpack.c.b16 %v689, %v685
  %v970 = vpack.c.b16 %v690, %v686
  %v971 = vpack.c.b16 %v691, %v687
  %v972 = vpack.c.b16 %v696, %v692
  %v973 = vpack.c.b16 %v697, %v693
  %v974 = vpack.c.b16 %v698, %v694
  %v975 = vpack.c.b16 %v699, %v695
  %v976 = vpack.c.b16 %v704, %v700
  %v977 = vpack.c.b16 %v705, %v701
  %v978 = vpack.c.b16 %v706, %v702
  %v979 = vpack.c.b16 %v707, %v703
  %v980 = vpack.c.b16 %v712, %v708
  %v981 = vpack.c.b16 %v713, %v709
  %v982 = vpack.c.b16 %v714, %v710
  %v983 = vpack.c.b16 %v715, %v711
  %v984 = vpack.c.b16 %v720, %v716
  %v985 = vpack.c.b16 %v721, %v717
  %v986 = vpack.c.b16 %v722, %v718
  %v987 = vpack.c.b16 %v723, %v719
  %v988 = vpack.c.b16 %v728, %v724
  %v989 = vpack.c.b16 %v729, %v725
  %v990 = vpack.c.b16 %v730, %v726
  %v991 = vpack.c.b16 %v731, %v727
  %v992 = vpack.c.b16 %v736, %v732
  %v993 = vpack.c.b16 %v737, %v733
  %v994 = vpack.c.b16 %v738, %v734
  %v995 = vpack.c.b16 %v739, %v735
  %v996 = vpack.c.b16 %v744, %v740
  %v997 = vpack.c.b16 %v745, %v741
  %v998 = vpack.c.b16 %v746, %v742
  %v999 = vpack.c.b16 %v747, %v743
  %v1000 = vpack.c.b16 %v752, %v748
  %v1001 = vpack.c.b16 %v753, %v749
  %v1002 = vpack.c.b16 %v754, %v750
  %v1003 = vpack.c.b16 %v755, %v751
  %v1004 = vpack.c.b16 %v760, %v756
  %v1005 = vpack.c.b16 %v761, %v757
  %v1006 = vpack.c.b16 %v762, %v758
  %v1007 = vpack.c.b16 %v763, %v759
  %v1008 = vpack.c.b16 %v768, %v764
  %v1009 = vpack.c.b16 %v769, %v765
  %v1010 = vpack.c.b16 %v770, %v766
  %v1011 = vpack.c.b16 %v771, %v767
  %v1012 = vpack.c.b16 %v776, %v772
  %v1013 = vpack.c.b16 %v777, %v773
  %v1014 = vpack.c.b16 %v778, %v774
  %v1015 = vpack.c.b16 %v779, %v775
  %v1016 = vpack.c.b16 %v784, %v780
  %v1017 = vpack.c.b16 %v785, %v781
  %v1018 = vpack.c.b16 %v786, %v782
  %v1019 = vpack.c.b16 %v787, %v783
  %v1020 = vpack.c.b16 %v792, %v788
  %v1021 = vpack.c.b16 %v793, %v789
  %v1022 = vpack.c.b16 %v794, %v790
  %v1023 = vpack.c.b16 %v795, %v791
  %v1024 = vpack.c.b16 %v800, %v796
  %v1025 = vpack.c.b16 %v801, %v797
  %v1026 = vpack.c.b16 %v802, %v798
  %v1027 = vpack.c.b16 %v803, %v799
  %v1028 = vpack.c.b16 %v808, %v804
  %v1029 = vpack.c.b16 %v809, %v805
  %v1030 = vpack.c.b16 %v810, %v806
  %v1031 = vpack.c.b16 %v811, %v807
  %v1032 = vpack.c.b16 %v816, %v812
  %v1033 = vpack.c.b16 %v817, %v813
  %v1034 = vpack.c.b16 %v818, %v814
  %v1035 = vpack.c.b16 %v819, %v815
  %v1036 = vpack.c.b16 %v824, %v820
  %v1037 = vpack.c.b16 %v825, %v821
  %v1038 = vpack.c.b16 %v826, %v822
  %v1039 = vpack.c.b16 %v827, %v823
  %v1040 = vpack.c.b16 %v832, %v828
  %v1041 = vpack.c.b16 %v833, %v829
  %v1042 = vpack.c.b16 %v834, %v830
  %v1043 = vpack.c.b16 %v835, %v831
  %v1044 = vpack.c.b16 %v840, %v836
  %v1045 = vpack.c.b16 %v841, %v837
  %v1046 = vpack.c.b16 %v842, %v838
  %v1047 = vpack.c.b16 %v843, %v839
  %v1048 = vpack.c.b16 %v848, %v844
  %v1049 = vpack.c.b16 %v849, %v845
  %v1050 = vpack.c.b16 %v850, %v846
  %v1051 = vpack.c.b16 %v851, %v847
  %v1052 = vpack.c.b16 %v856, %v852
  %v1053 = vpack.c.b16 %v857, %v853
  %v1054 = vpack.c.b16 %v858, %v854
  %v1055 = vpack.c.b16 %v859, %v855
  %vm1252 = vcmask 130048
  %v1254 = vsel %vm1252, %v53, 0
  %1256 = vmatprep.subr.bf16.mxu0 %v889
  %1257 = vmatpush1.bf16.msra.mxu0 %v888
  %1258 = vmatprep.subr.bf16.mxu0 %v885
  %1259 = vmatpush1.bf16.msra.mxu0 %v884
  %1260 = vmatprep.subr.bf16.mxu0 %v881
  %1261 = vmatpush1.bf16.msra.mxu0 %v880
  %1262 = vmatprep.subr.bf16.mxu0 %v877
  %1263 = vmatpush1.bf16.msra.mxu0 %v876
  %1264 = vmatprep.subr.bf16.mxu0 %v873
  %1265 = vmatpush1.bf16.msra.mxu0 %v872
  %1266 = vmatprep.subr.bf16.mxu0 %v869
  %1267 = vmatpush1.bf16.msra.mxu0 %v868
  %1268 = vmatprep.subr.bf16.mxu0 %v865
  %1269 = vmatpush1.bf16.msra.mxu0 %v864
  %1270 = vmatprep.subr.bf16.mxu0 %v861
  %1271 = vmatpush1.bf16.msra.mxu0 %v860
  %1272 = vmatprep.subr.bf16.mxu0 %v921
  %1273 = vmatpush2.bf16.msra.mxu0 %v920
  %1274 = vmatprep.subr.bf16.mxu0 %v917
  %1275 = vmatpush2.bf16.msra.mxu0 %v916
  %1276 = vmatprep.subr.bf16.mxu0 %v913
  %1277 = vmatpush2.bf16.msra.mxu0 %v912
  %1278 = vmatprep.subr.bf16.mxu0 %v909
  %1279 = vmatpush2.bf16.msra.mxu0 %v908
  %1280 = vmatprep.subr.bf16.mxu0 %v905
  %1281 = vmatpush2.bf16.msra.mxu0 %v904
  %1282 = vmatprep.subr.bf16.mxu0 %v901
  %1283 = vmatpush2.bf16.msra.mxu0 %v900
  %1284 = vmatprep.subr.bf16.mxu0 %v897
  %1285 = vmatpush2.bf16.msra.mxu0 %v896
  %1286 = vmatprep.subr.bf16.mxu0 %v893
  %1287 = vmatpush2.bf16.msra.mxu0 %v892
  %1288 = vmatprep.mubr.bf16.mxu0 %v48
  %1289 = vmatmul.mubr.bf16.gmra.mxu0 %v47
  %v1290 = vpop.f32.mrf.mxu0
  %v1291 = vadd.f32 %v255, %v1290
  %v1292 = vpop.f32.mrf.mxu0
  %v1293 = vadd.f32 %v259, %v1292
  %v1294 = vpop.f32.mrf.mxu0
  %v1295 = vadd.f32 %v255, %v1294
  %v1296 = vpop.f32.mrf.mxu0
  %v1297 = vadd.f32 %v259, %v1296
  %1298 = vdwg.mxu0
  %1299 = vmatprep.subr.bf16.mxu0 %v953
  %1300 = vmatpush1.bf16.msra.mxu0 %v952
  %1301 = vmatprep.subr.bf16.mxu0 %v949
  %1302 = vmatpush1.bf16.msra.mxu0 %v948
  %1303 = vmatprep.subr.bf16.mxu0 %v945
  %1304 = vmatpush1.bf16.msra.mxu0 %v944
  %1305 = vmatprep.subr.bf16.mxu0 %v941
  %1306 = vmatpush1.bf16.msra.mxu0 %v940
  %1307 = vmatprep.subr.bf16.mxu0 %v937
  %1308 = vmatpush1.bf16.msra.mxu0 %v936
  %1309 = vmatprep.subr.bf16.mxu0 %v933
  %1310 = vmatpush1.bf16.msra.mxu0 %v932
  %1311 = vmatprep.subr.bf16.mxu0 %v929
  %1312 = vmatpush1.bf16.msra.mxu0 %v928
  %1313 = vmatprep.subr.bf16.mxu0 %v925
  %1314 = vmatpush1.bf16.msra.mxu0 %v924
  %1315 = vmatprep.subr.bf16.mxu0 %v985
  %1316 = vmatpush2.bf16.msra.mxu0 %v984
  %1317 = vmatprep.subr.bf16.mxu0 %v981
  %1318 = vmatpush2.bf16.msra.mxu0 %v980
  %1319 = vmatprep.subr.bf16.mxu0 %v977
  %1320 = vmatpush2.bf16.msra.mxu0 %v976
  %1321 = vmatprep.subr.bf16.mxu0 %v973
  %1322 = vmatpush2.bf16.msra.mxu0 %v972
  %1323 = vmatprep.subr.bf16.mxu0 %v969
  %1324 = vmatpush2.bf16.msra.mxu0 %v968
  %1325 = vmatprep.subr.bf16.mxu0 %v965
  %1326 = vmatpush2.bf16.msra.mxu0 %v964
  %1327 = vmatprep.subr.bf16.mxu0 %v961
  %1328 = vmatpush2.bf16.msra.mxu0 %v960
  %1329 = vmatprep.subr.bf16.mxu0 %v957
  %1330 = vmatpush2.bf16.msra.mxu0 %v956
  %1331 = vmatprep.mubr.bf16.mxu0 %v50
  %1332 = vmatmul.mubr.bf16.gmra.mxu0 %v49
  %v1333 = vpop.f32.mrf.mxu0
  %v1334 = vadd.f32 %v1291, %v1333
  %v1335 = vpop.f32.mrf.mxu0
  %v1336 = vadd.f32 %v1293, %v1335
  %v1337 = vpop.f32.mrf.mxu0
  %v1338 = vadd.f32 %v1295, %v1337
  %v1339 = vpop.f32.mrf.mxu0
  %v1340 = vadd.f32 %v1297, %v1339
  %1341 = vdwg.mxu0
  %1342 = vmatprep.subr.bf16.mxu0 %v1017
  %1343 = vmatpush1.bf16.msra.mxu0 %v1016
  %1344 = vmatprep.subr.bf16.mxu0 %v1013
  %1345 = vmatpush1.bf16.msra.mxu0 %v1012
  %1346 = vmatprep.subr.bf16.mxu0 %v1009
  %1347 = vmatpush1.bf16.msra.mxu0 %v1008
  %1348 = vmatprep.subr.bf16.mxu0 %v1005
  %1349 = vmatpush1.bf16.msra.mxu0 %v1004
  %1350 = vmatprep.subr.bf16.mxu0 %v1001
  %1351 = vmatpush1.bf16.msra.mxu0 %v1000
  %1352 = vmatprep.subr.bf16.mxu0 %v997
  %1353 = vmatpush1.bf16.msra.mxu0 %v996
  %1354 = vmatprep.subr.bf16.mxu0 %v993
  %1355 = vmatpush1.bf16.msra.mxu0 %v992
  %1356 = vmatprep.subr.bf16.mxu0 %v989
  %1357 = vmatpush1.bf16.msra.mxu0 %v988
  %1358 = vmatprep.subr.bf16.mxu0 %v1049
  %1359 = vmatpush2.bf16.msra.mxu0 %v1048
  %1360 = vmatprep.subr.bf16.mxu0 %v1045
  %1361 = vmatpush2.bf16.msra.mxu0 %v1044
  %1362 = vmatprep.subr.bf16.mxu0 %v1041
  %1363 = vmatpush2.bf16.msra.mxu0 %v1040
  %1364 = vmatprep.subr.bf16.mxu0 %v1037
  %1365 = vmatpush2.bf16.msra.mxu0 %v1036
  %1366 = vmatprep.subr.bf16.mxu0 %v1033
  %1367 = vmatpush2.bf16.msra.mxu0 %v1032
  %1368 = vmatprep.subr.bf16.mxu0 %v1029
  %1369 = vmatpush2.bf16.msra.mxu0 %v1028
  %1370 = vmatprep.subr.bf16.mxu0 %v1025
  %1371 = vmatpush2.bf16.msra.mxu0 %v1024
  %1372 = vmatprep.subr.bf16.mxu0 %v1021
  %1373 = vmatpush2.bf16.msra.mxu0 %v1020
  %1374 = vmatprep.mubr.bf16.mxu0 %v52
  %1375 = vmatmul.mubr.bf16.gmra.mxu0 %v51
  %v1376 = vpop.f32.mrf.mxu0
  %v1377 = vadd.f32 %v1334, %v1376
  %v1378 = vpop.f32.mrf.mxu0
  %v1379 = vadd.f32 %v1336, %v1378
  %v1380 = vpop.f32.mrf.mxu0
  %v1381 = vadd.f32 %v1338, %v1380
  %v1382 = vpop.f32.mrf.mxu0
  %v1383 = vadd.f32 %v1340, %v1382
  %1384 = vdwg.mxu0
  %1385 = vmatprep.subr.bf16.mxu0 0
  %1386 = vmatpush1.bf16.msra.mxu0 0
  %1387 = vmatprep.subr.bf16.mxu0 0
  %1388 = vmatpush1.bf16.msra.mxu0 0
  %1389 = vmatprep.subr.bf16.mxu0 0
  %1390 = vmatpush1.bf16.msra.mxu0 0
  %1391 = vmatprep.subr.bf16.mxu0 0
  %1392 = vmatpush1.bf16.msra.mxu0 0
  %1393 = vmatprep.subr.bf16.mxu0 0
  %1394 = vmatpush1.bf16.msra.mxu0 0
  %1395 = vmatprep.subr.bf16.mxu0 0
  %1396 = vmatpush1.bf16.msra.mxu0 0
  %1397 = vmatprep.subr.bf16.mxu0 0
  %1398 = vmatpush1.bf16.msra.mxu0 0
  %1399 = vmatprep.subr.bf16.mxu0 %v1053
  %1400 = vmatpush1.bf16.msra.mxu0 %v1052
  %1401 = vmatprep.subr.bf16.mxu0 0
  %1402 = vmatpush2.bf16.msra.mxu0 0
  %1403 = vmatprep.subr.bf16.mxu0 0
  %1404 = vmatpush2.bf16.msra.mxu0 0
  %1405 = vmatprep.subr.bf16.mxu0 0
  %1406 = vmatpush2.bf16.msra.mxu0 0
  %1407 = vmatprep.subr.bf16.mxu0 0
  %1408 = vmatpush2.bf16.msra.mxu0 0
  %1409 = vmatprep.subr.bf16.mxu0 0
  %1410 = vmatpush2.bf16.msra.mxu0 0
  %1411 = vmatprep.subr.bf16.mxu0 0
  %1412 = vmatpush2.bf16.msra.mxu0 0
  %1413 = vmatprep.subr.bf16.mxu0 0
  %1414 = vmatpush2.bf16.msra.mxu0 0
  %1415 = vmatprep.subr.bf16.mxu0 0
  %1416 = vmatpush2.bf16.msra.mxu0 0
  %1417 = vmatprep.mubr.bf16.mxu0 0
  %1418 = vmatmul.mubr.bf16.gmra.mxu0 %v1254
  %v1419 = vpop.f32.mrf.mxu0
  %v1420 = vadd.f32 %v1377, %v1419
  %v1421 = vpop.f32.mrf.mxu0
  %v1422 = vadd.f32 %v1379, %v1421
  %v1423 = vpop.f32.mrf.mxu0
  %v1424 = vadd.f32 %v1381, %v1423
  %v1425 = vpop.f32.mrf.mxu0
  %v1426 = vadd.f32 %v1383, %v1425
  %1427 = vdwg.mxu0
  %1428 = vmatprep.subr.bf16.mxu0 %v891
  %1429 = vmatpush1.bf16.msra.mxu0 %v890
  %1430 = vmatprep.subr.bf16.mxu0 %v887
  %1431 = vmatpush1.bf16.msra.mxu0 %v886
  %1432 = vmatprep.subr.bf16.mxu0 %v883
  %1433 = vmatpush1.bf16.msra.mxu0 %v882
  %1434 = vmatprep.subr.bf16.mxu0 %v879
  %1435 = vmatpush1.bf16.msra.mxu0 %v878
  %1436 = vmatprep.subr.bf16.mxu0 %v875
  %1437 = vmatpush1.bf16.msra.mxu0 %v874
  %1438 = vmatprep.subr.bf16.mxu0 %v871
  %1439 = vmatpush1.bf16.msra.mxu0 %v870
  %1440 = vmatprep.subr.bf16.mxu0 %v867
  %1441 = vmatpush1.bf16.msra.mxu0 %v866
  %1442 = vmatprep.subr.bf16.mxu0 %v863
  %1443 = vmatpush1.bf16.msra.mxu0 %v862
  %1444 = vmatprep.subr.bf16.mxu0 %v923
  %1445 = vmatpush2.bf16.msra.mxu0 %v922
  %1446 = vmatprep.subr.bf16.mxu0 %v919
  %1447 = vmatpush2.bf16.msra.mxu0 %v918
  %1448 = vmatprep.subr.bf16.mxu0 %v915
  %1449 = vmatpush2.bf16.msra.mxu0 %v914
  %1450 = vmatprep.subr.bf16.mxu0 %v911
  %1451 = vmatpush2.bf16.msra.mxu0 %v910
  %1452 = vmatprep.subr.bf16.mxu0 %v907
  %1453 = vmatpush2.bf16.msra.mxu0 %v906
  %1454 = vmatprep.subr.bf16.mxu0 %v903
  %1455 = vmatpush2.bf16.msra.mxu0 %v902
  %1456 = vmatprep.subr.bf16.mxu0 %v899
  %1457 = vmatpush2.bf16.msra.mxu0 %v898
  %1458 = vmatprep.subr.bf16.mxu0 %v895
  %1459 = vmatpush2.bf16.msra.mxu0 %v894
  %1460 = vmatprep.mubr.bf16.mxu0 %v48
  %1461 = vmatmul.mubr.bf16.gmra.mxu0 %v47
  %v1462 = vpop.f32.mrf.mxu0
  %v1463 = vadd.f32 %v263, %v1462
  %v1464 = vpop.f32.mrf.mxu0
  %v1465 = vadd.f32 %v267, %v1464
  %v1466 = vpop.f32.mrf.mxu0
  %v1467 = vadd.f32 %v263, %v1466
  %v1468 = vpop.f32.mrf.mxu0
  %v1469 = vadd.f32 %v267, %v1468
  %1470 = vdwg.mxu0
  %1471 = vmatprep.subr.bf16.mxu0 %v955
  %1472 = vmatpush1.bf16.msra.mxu0 %v954
  %1473 = vmatprep.subr.bf16.mxu0 %v951
  %1474 = vmatpush1.bf16.msra.mxu0 %v950
  %1475 = vmatprep.subr.bf16.mxu0 %v947
  %1476 = vmatpush1.bf16.msra.mxu0 %v946
  %1477 = vmatprep.subr.bf16.mxu0 %v943
  %1478 = vmatpush1.bf16.msra.mxu0 %v942
  %1479 = vmatprep.subr.bf16.mxu0 %v939
  %1480 = vmatpush1.bf16.msra.mxu0 %v938
  %1481 = vmatprep.subr.bf16.mxu0 %v935
  %1482 = vmatpush1.bf16.msra.mxu0 %v934
  %1483 = vmatprep.subr.bf16.mxu0 %v931
  %1484 = vmatpush1.bf16.msra.mxu0 %v930
  %1485 = vmatprep.subr.bf16.mxu0 %v927
  %1486 = vmatpush1.bf16.msra.mxu0 %v926
  %1487 = vmatprep.subr.bf16.mxu0 %v987
  %1488 = vmatpush2.bf16.msra.mxu0 %v986
  %1489 = vmatprep.subr.bf16.mxu0 %v983
  %1490 = vmatpush2.bf16.msra.mxu0 %v982
  %1491 = vmatprep.subr.bf16.mxu0 %v979
  %1492 = vmatpush2.bf16.msra.mxu0 %v978
  %1493 = vmatprep.subr.bf16.mxu0 %v975
  %1494 = vmatpush2.bf16.msra.mxu0 %v974
  %1495 = vmatprep.subr.bf16.mxu0 %v971
  %1496 = vmatpush2.bf16.msra.mxu0 %v970
  %1497 = vmatprep.subr.bf16.mxu0 %v967
  %1498 = vmatpush2.bf16.msra.mxu0 %v966
  %1499 = vmatprep.subr.bf16.mxu0 %v963
  %1500 = vmatpush2.bf16.msra.mxu0 %v962
  %1501 = vmatprep.subr.bf16.mxu0 %v959
  %1502 = vmatpush2.bf16.msra.mxu0 %v958
  %1503 = vmatprep.mubr.bf16.mxu0 %v50
  %1504 = vmatmul.mubr.bf16.gmra.mxu0 %v49
  %v1505 = vpop.f32.mrf.mxu0
  %v1506 = vadd.f32 %v1463, %v1505
  %v1507 = vpop.f32.mrf.mxu0
  %v1508 = vadd.f32 %v1465, %v1507
  %v1509 = vpop.f32.mrf.mxu0
  %v1510 = vadd.f32 %v1467, %v1509
  %v1511 = vpop.f32.mrf.mxu0
  %v1512 = vadd.f32 %v1469, %v1511
  %1513 = vdwg.mxu0
  %1514 = vmatprep.subr.bf16.mxu0 %v1019
  %1515 = vmatpush1.bf16.msra.mxu0 %v1018
  %1516 = vmatprep.subr.bf16.mxu0 %v1015
  %1517 = vmatpush1.bf16.msra.mxu0 %v1014
  %1518 = vmatprep.subr.bf16.mxu0 %v1011
  %1519 = vmatpush1.bf16.msra.mxu0 %v1010
  %1520 = vmatprep.subr.bf16.mxu0 %v1007
  %1521 = vmatpush1.bf16.msra.mxu0 %v1006
  %1522 = vmatprep.subr.bf16.mxu0 %v1003
  %1523 = vmatpush1.bf16.msra.mxu0 %v1002
  %1524 = vmatprep.subr.bf16.mxu0 %v999
  %1525 = vmatpush1.bf16.msra.mxu0 %v998
  %1526 = vmatprep.subr.bf16.mxu0 %v995
  %1527 = vmatpush1.bf16.msra.mxu0 %v994
  %1528 = vmatprep.subr.bf16.mxu0 %v991
  %1529 = vmatpush1.bf16.msra.mxu0 %v990
  %1530 = vmatprep.subr.bf16.mxu0 %v1051
  %1531 = vmatpush2.bf16.msra.mxu0 %v1050
  %1532 = vmatprep.subr.bf16.mxu0 %v1047
  %1533 = vmatpush2.bf16.msra.mxu0 %v1046
  %1534 = vmatprep.subr.bf16.mxu0 %v1043
  %1535 = vmatpush2.bf16.msra.mxu0 %v1042
  %1536 = vmatprep.subr.bf16.mxu0 %v1039
  %1537 = vmatpush2.bf16.msra.mxu0 %v1038
  %1538 = vmatprep.subr.bf16.mxu0 %v1035
  %1539 = vmatpush2.bf16.msra.mxu0 %v1034
  %1540 = vmatprep.subr.bf16.mxu0 %v1031
  %1541 = vmatpush2.bf16.msra.mxu0 %v1030
  %1542 = vmatprep.subr.bf16.mxu0 %v1027
  %1543 = vmatpush2.bf16.msra.mxu0 %v1026
  %1544 = vmatprep.subr.bf16.mxu0 %v1023
  %1545 = vmatpush2.bf16.msra.mxu0 %v1022
  %1546 = vmatprep.mubr.bf16.mxu0 %v52
  %1547 = vmatmul.mubr.bf16.gmra.mxu0 %v51
  %v1548 = vpop.f32.mrf.mxu0
  %v1549 = vadd.f32 %v1506, %v1548
  %v1550 = vpop.f32.mrf.mxu0
  %v1551 = vadd.f32 %v1508, %v1550
  %v1552 = vpop.f32.mrf.mxu0
  %v1553 = vadd.f32 %v1510, %v1552
  %v1554 = vpop.f32.mrf.mxu0
  %v1555 = vadd.f32 %v1512, %v1554
  %1556 = vdwg.mxu0
  %1557 = vmatprep.subr.bf16.mxu0 0
  %1558 = vmatpush1.bf16.msra.mxu0 0
  %1559 = vmatprep.subr.bf16.mxu0 0
  %1560 = vmatpush1.bf16.msra.mxu0 0
  %1561 = vmatprep.subr.bf16.mxu0 0
  %1562 = vmatpush1.bf16.msra.mxu0 0
  %1563 = vmatprep.subr.bf16.mxu0 0
  %1564 = vmatpush1.bf16.msra.mxu0 0
  %1565 = vmatprep.subr.bf16.mxu0 0
  %1566 = vmatpush1.bf16.msra.mxu0 0
  %1567 = vmatprep.subr.bf16.mxu0 0
  %1568 = vmatpush1.bf16.msra.mxu0 0
  %1569 = vmatprep.subr.bf16.mxu0 0
  %1570 = vmatpush1.bf16.msra.mxu0 0
  %1571 = vmatprep.subr.bf16.mxu0 %v1055
  %1572 = vmatpush1.bf16.msra.mxu0 %v1054
  %1573 = vmatprep.subr.bf16.mxu0 0
  %1574 = vmatpush2.bf16.msra.mxu0 0
  %1575 = vmatprep.subr.bf16.mxu0 0
  %1576 = vmatpush2.bf16.msra.mxu0 0
  %1577 = vmatprep.subr.bf16.mxu0 0
  %1578 = vmatpush2.bf16.msra.mxu0 0
  %1579 = vmatprep.subr.bf16.mxu0 0
  %1580 = vmatpush2.bf16.msra.mxu0 0
  %1581 = vmatprep.subr.bf16.mxu0 0
  %1582 = vmatpush2.bf16.msra.mxu0 0
  %1583 = vmatprep.subr.bf16.mxu0 0
  %1584 = vmatpush2.bf16.msra.mxu0 0
  %1585 = vmatprep.subr.bf16.mxu0 0
  %1586 = vmatpush2.bf16.msra.mxu0 0
  %1587 = vmatprep.subr.bf16.mxu0 0
  %1588 = vmatpush2.bf16.msra.mxu0 0
  %1589 = vmatprep.mubr.bf16.mxu0 0
  %1590 = vmatmul.mubr.bf16.gmra.mxu0 %v1254
  %v1591 = vpop.f32.mrf.mxu0
  %v1592 = vadd.f32 %v1549, %v1591
  %v1593 = vpop.f32.mrf.mxu0
  %v1594 = vadd.f32 %v1551, %v1593
  %v1595 = vpop.f32.mrf.mxu0
  %v1596 = vadd.f32 %v1553, %v1595
  %v1597 = vpop.f32.mrf.mxu0
  %v1598 = vadd.f32 %v1555, %v1597
  %1599 = vdwg.mxu0
  %v1600 = vld [vmem:[%s1] sm:$0xff]
  %v1601 = vld [vmem:[%s1 + $0x8] sm:$0xff]
  %v1602 = vld [vmem:[%s3] sm:$0xff]
  %v1603 = vld [vmem:[%s3 + $0x8] sm:$0xff]
  %v1604 = vld [vmem:[%s3 + $0x10] sm:$0xff]
  %v1605 = vld [vmem:[%s3 + $0x18] sm:$0xff]
  %v1606 = vld [vmem:[%s3 + $0x20] sm:$0x3]
  %v1607 = vld [vmem:[%s3 + $0x28] sm:$0x3]
  %v1608 = vld [vmem:[%s3 + $0x30] sm:$0x3]
  %v1609 = vld [vmem:[%s3 + $0x38] sm:$0x3]
  %1611 = vset.pattern.permute.xlu0 0
  %1612 = vperm.xlu0 %1611, %v1600
  %v1613 = vpop.permute.xlu0 %1612
  %1616 = vset.pattern.permute.xlu0 0
  %1617 = vperm.xlu0 %1616, %v1601
  %v1618 = vpop.permute.xlu0 %1617
  %v1620 = vlaneseq
  %v1621 = vshrl.u32 %v1620, 7
  %v1622 = vsub.s32 0, %v1621
  %v1623 = vrot.slane %v1602, %v1622
  %v1624 = vlaneseq
  %v1625 = vshrl.u32 %v1624, 7
  %v1626 = vsub.s32 0, %v1625
  %v1627 = vrot.slane %v1603, %v1626
  %v1628 = vlaneseq
  %v1629 = vshrl.u32 %v1628, 7
  %v1630 = vsub.s32 0, %v1629
  %v1631 = vrot.slane %v1604, %v1630
  %v1632 = vlaneseq
  %v1633 = vshrl.u32 %v1632, 7
  %v1634 = vsub.s32 0, %v1633
  %v1635 = vrot.slane %v1605, %v1634
  %v1636 = vmul.f32 %v1613, %v1623
  %v1637 = vmul.f32 %v1613, %v1627
  %v1638 = vmul.f32 %v1613, %v1631
  %v1639 = vmul.f32 %v1613, %v1635
  %v1640 = vmul.f32 %v1618, %v1623
  %v1641 = vmul.f32 %v1618, %v1627
  %v1642 = vmul.f32 %v1618, %v1631
  %v1643 = vmul.f32 %v1618, %v1635
  %v1644 = vadd.f32 %v1420, %v1636
  %v1645 = vadd.f32 %v1422, %v1637
  %v1646 = vadd.f32 %v1592, %v1638
  %v1647 = vadd.f32 %v1594, %v1639
  %v1648 = vadd.f32 %v1424, %v1640
  %v1649 = vadd.f32 %v1426, %v1641
  %v1650 = vadd.f32 %v1596, %v1642
  %v1651 = vadd.f32 %v1598, %v1643
  %1652 = vset.pattern.permute.xlu0 1
  %1653 = vperm.xlu0 %1652, %v1600
  %v1654 = vpop.permute.xlu0 %1653
  %1656 = vset.pattern.permute.xlu0 1
  %1657 = vperm.xlu0 %1656, %v1601
  %v1658 = vpop.permute.xlu0 %1657
  %v1660 = vlaneseq
  %v1661 = vshrl.u32 %v1660, 7
  %v1662 = vsub.s32 1, %v1661
  %v1663 = vrot.slane %v1602, %v1662
  %v1664 = vlaneseq
  %v1665 = vshrl.u32 %v1664, 7
  %v1666 = vsub.s32 1, %v1665
  %v1667 = vrot.slane %v1603, %v1666
  %v1668 = vlaneseq
  %v1669 = vshrl.u32 %v1668, 7
  %v1670 = vsub.s32 1, %v1669
  %v1671 = vrot.slane %v1604, %v1670
  %v1672 = vlaneseq
  %v1673 = vshrl.u32 %v1672, 7
  %v1674 = vsub.s32 1, %v1673
  %v1675 = vrot.slane %v1605, %v1674
  %v1676 = vmul.f32 %v1654, %v1663
  %v1677 = vmul.f32 %v1654, %v1667
  %v1678 = vmul.f32 %v1654, %v1671
  %v1679 = vmul.f32 %v1654, %v1675
  %v1680 = vmul.f32 %v1658, %v1663
  %v1681 = vmul.f32 %v1658, %v1667
  %v1682 = vmul.f32 %v1658, %v1671
  %v1683 = vmul.f32 %v1658, %v1675
  %v1684 = vadd.f32 %v1644, %v1676
  %v1685 = vadd.f32 %v1645, %v1677
  %v1686 = vadd.f32 %v1646, %v1678
  %v1687 = vadd.f32 %v1647, %v1679
  %v1688 = vadd.f32 %v1648, %v1680
  %v1689 = vadd.f32 %v1649, %v1681
  %v1690 = vadd.f32 %v1650, %v1682
  %v1691 = vadd.f32 %v1651, %v1683
  %1692 = vset.pattern.permute.xlu0 2
  %1693 = vperm.xlu0 %1692, %v1600
  %v1694 = vpop.permute.xlu0 %1693
  %1696 = vset.pattern.permute.xlu0 2
  %1697 = vperm.xlu0 %1696, %v1601
  %v1698 = vpop.permute.xlu0 %1697
  %v1700 = vlaneseq
  %v1701 = vshrl.u32 %v1700, 7
  %v1702 = vsub.s32 2, %v1701
  %v1703 = vrot.slane %v1602, %v1702
  %v1704 = vlaneseq
  %v1705 = vshrl.u32 %v1704, 7
  %v1706 = vsub.s32 2, %v1705
  %v1707 = vrot.slane %v1603, %v1706
  %v1708 = vlaneseq
  %v1709 = vshrl.u32 %v1708, 7
  %v1710 = vsub.s32 2, %v1709
  %v1711 = vrot.slane %v1604, %v1710
  %v1712 = vlaneseq
  %v1713 = vshrl.u32 %v1712, 7
  %v1714 = vsub.s32 2, %v1713
  %v1715 = vrot.slane %v1605, %v1714
  %v1716 = vmul.f32 %v1694, %v1703
  %v1717 = vmul.f32 %v1694, %v1707
  %v1718 = vmul.f32 %v1694, %v1711
  %v1719 = vmul.f32 %v1694, %v1715
  %v1720 = vmul.f32 %v1698, %v1703
  %v1721 = vmul.f32 %v1698, %v1707
  %v1722 = vmul.f32 %v1698, %v1711
  %v1723 = vmul.f32 %v1698, %v1715
  %v1724 = vadd.f32 %v1684, %v1716
  %v1725 = vadd.f32 %v1685, %v1717
  %v1726 = vadd.f32 %v1686, %v1718
  %v1727 = vadd.f32 %v1687, %v1719
  %v1728 = vadd.f32 %v1688, %v1720
  %v1729 = vadd.f32 %v1689, %v1721
  %v1730 = vadd.f32 %v1690, %v1722
  %v1731 = vadd.f32 %v1691, %v1723
  %1732 = vset.pattern.permute.xlu0 3
  %1733 = vperm.xlu0 %1732, %v1600
  %v1734 = vpop.permute.xlu0 %1733
  %1736 = vset.pattern.permute.xlu0 3
  %1737 = vperm.xlu0 %1736, %v1601
  %v1738 = vpop.permute.xlu0 %1737
  %v1740 = vlaneseq
  %v1741 = vshrl.u32 %v1740, 7
  %v1742 = vsub.s32 3, %v1741
  %v1743 = vrot.slane %v1602, %v1742
  %v1744 = vlaneseq
  %v1745 = vshrl.u32 %v1744, 7
  %v1746 = vsub.s32 3, %v1745
  %v1747 = vrot.slane %v1603, %v1746
  %v1748 = vlaneseq
  %v1749 = vshrl.u32 %v1748, 7
  %v1750 = vsub.s32 3, %v1749
  %v1751 = vrot.slane %v1604, %v1750
  %v1752 = vlaneseq
  %v1753 = vshrl.u32 %v1752, 7
  %v1754 = vsub.s32 3, %v1753
  %v1755 = vrot.slane %v1605, %v1754
  %v1756 = vmul.f32 %v1734, %v1743
  %v1757 = vmul.f32 %v1734, %v1747
  %v1758 = vmul.f32 %v1734, %v1751
  %v1759 = vmul.f32 %v1734, %v1755
  %v1760 = vmul.f32 %v1738, %v1743
  %v1761 = vmul.f32 %v1738, %v1747
  %v1762 = vmul.f32 %v1738, %v1751
  %v1763 = vmul.f32 %v1738, %v1755
  %v1764 = vadd.f32 %v1724, %v1756
  %v1765 = vadd.f32 %v1725, %v1757
  %v1766 = vadd.f32 %v1726, %v1758
  %v1767 = vadd.f32 %v1727, %v1759
  %v1768 = vadd.f32 %v1728, %v1760
  %v1769 = vadd.f32 %v1729, %v1761
  %v1770 = vadd.f32 %v1730, %v1762
  %v1771 = vadd.f32 %v1731, %v1763
  %1772 = vset.pattern.permute.xlu0 4
  %1773 = vperm.xlu0 %1772, %v1600
  %v1774 = vpop.permute.xlu0 %1773
  %1776 = vset.pattern.permute.xlu0 4
  %1777 = vperm.xlu0 %1776, %v1601
  %v1778 = vpop.permute.xlu0 %1777
  %v1780 = vlaneseq
  %v1781 = vshrl.u32 %v1780, 7
  %v1782 = vsub.s32 4, %v1781
  %v1783 = vrot.slane %v1602, %v1782
  %v1784 = vlaneseq
  %v1785 = vshrl.u32 %v1784, 7
  %v1786 = vsub.s32 4, %v1785
  %v1787 = vrot.slane %v1603, %v1786
  %v1788 = vlaneseq
  %v1789 = vshrl.u32 %v1788, 7
  %v1790 = vsub.s32 4, %v1789
  %v1791 = vrot.slane %v1604, %v1790
  %v1792 = vlaneseq
  %v1793 = vshrl.u32 %v1792, 7
  %v1794 = vsub.s32 4, %v1793
  %v1795 = vrot.slane %v1605, %v1794
  %v1796 = vmul.f32 %v1774, %v1783
  %v1797 = vmul.f32 %v1774, %v1787
  %v1798 = vmul.f32 %v1774, %v1791
  %v1799 = vmul.f32 %v1774, %v1795
  %v1800 = vmul.f32 %v1778, %v1783
  %v1801 = vmul.f32 %v1778, %v1787
  %v1802 = vmul.f32 %v1778, %v1791
  %v1803 = vmul.f32 %v1778, %v1795
  %v1804 = vadd.f32 %v1764, %v1796
  %v1805 = vadd.f32 %v1765, %v1797
  %v1806 = vadd.f32 %v1766, %v1798
  %v1807 = vadd.f32 %v1767, %v1799
  %v1808 = vadd.f32 %v1768, %v1800
  %v1809 = vadd.f32 %v1769, %v1801
  %v1810 = vadd.f32 %v1770, %v1802
  %v1811 = vadd.f32 %v1771, %v1803
  %1812 = vset.pattern.permute.xlu0 5
  %1813 = vperm.xlu0 %1812, %v1600
  %v1814 = vpop.permute.xlu0 %1813
  %1816 = vset.pattern.permute.xlu0 5
  %1817 = vperm.xlu0 %1816, %v1601
  %v1818 = vpop.permute.xlu0 %1817
  %v1820 = vlaneseq
  %v1821 = vshrl.u32 %v1820, 7
  %v1822 = vsub.s32 5, %v1821
  %v1823 = vrot.slane %v1602, %v1822
  %v1824 = vlaneseq
  %v1825 = vshrl.u32 %v1824, 7
  %v1826 = vsub.s32 5, %v1825
  %v1827 = vrot.slane %v1603, %v1826
  %v1828 = vlaneseq
  %v1829 = vshrl.u32 %v1828, 7
  %v1830 = vsub.s32 5, %v1829
  %v1831 = vrot.slane %v1604, %v1830
  %v1832 = vlaneseq
  %v1833 = vshrl.u32 %v1832, 7
  %v1834 = vsub.s32 5, %v1833
  %v1835 = vrot.slane %v1605, %v1834
  %v1836 = vmul.f32 %v1814, %v1823
  %v1837 = vmul.f32 %v1814, %v1827
  %v1838 = vmul.f32 %v1814, %v1831
  %v1839 = vmul.f32 %v1814, %v1835
  %v1840 = vmul.f32 %v1818, %v1823
  %v1841 = vmul.f32 %v1818, %v1827
  %v1842 = vmul.f32 %v1818, %v1831
  %v1843 = vmul.f32 %v1818, %v1835
  %v1844 = vadd.f32 %v1804, %v1836
  %v1845 = vadd.f32 %v1805, %v1837
  %v1846 = vadd.f32 %v1806, %v1838
  %v1847 = vadd.f32 %v1807, %v1839
  %v1848 = vadd.f32 %v1808, %v1840
  %v1849 = vadd.f32 %v1809, %v1841
  %v1850 = vadd.f32 %v1810, %v1842
  %v1851 = vadd.f32 %v1811, %v1843
  %1852 = vset.pattern.permute.xlu0 6
  %1853 = vperm.xlu0 %1852, %v1600
  %v1854 = vpop.permute.xlu0 %1853
  %1856 = vset.pattern.permute.xlu0 6
  %1857 = vperm.xlu0 %1856, %v1601
  %v1858 = vpop.permute.xlu0 %1857
  %v1860 = vlaneseq
  %v1861 = vshrl.u32 %v1860, 7
  %v1862 = vsub.s32 6, %v1861
  %v1863 = vrot.slane %v1602, %v1862
  %v1864 = vlaneseq
  %v1865 = vshrl.u32 %v1864, 7
  %v1866 = vsub.s32 6, %v1865
  %v1867 = vrot.slane %v1603, %v1866
  %v1868 = vlaneseq
  %v1869 = vshrl.u32 %v1868, 7
  %v1870 = vsub.s32 6, %v1869
  %v1871 = vrot.slane %v1604, %v1870
  %v1872 = vlaneseq
  %v1873 = vshrl.u32 %v1872, 7
  %v1874 = vsub.s32 6, %v1873
  %v1875 = vrot.slane %v1605, %v1874
  %v1876 = vmul.f32 %v1854, %v1863
  %v1877 = vmul.f32 %v1854, %v1867
  %v1878 = vmul.f32 %v1854, %v1871
  %v1879 = vmul.f32 %v1854, %v1875
  %v1880 = vmul.f32 %v1858, %v1863
  %v1881 = vmul.f32 %v1858, %v1867
  %v1882 = vmul.f32 %v1858, %v1871
  %v1883 = vmul.f32 %v1858, %v1875
  %v1884 = vadd.f32 %v1844, %v1876
  %v1885 = vadd.f32 %v1845, %v1877
  %v1886 = vadd.f32 %v1846, %v1878
  %v1887 = vadd.f32 %v1847, %v1879
  %v1888 = vadd.f32 %v1848, %v1880
  %v1889 = vadd.f32 %v1849, %v1881
  %v1890 = vadd.f32 %v1850, %v1882
  %v1891 = vadd.f32 %v1851, %v1883
  %1892 = vset.pattern.permute.xlu0 7
  %1893 = vperm.xlu0 %1892, %v1600
  %v1894 = vpop.permute.xlu0 %1893
  %1896 = vset.pattern.permute.xlu0 7
  %1897 = vperm.xlu0 %1896, %v1601
  %v1898 = vpop.permute.xlu0 %1897
  %v1900 = vlaneseq
  %v1901 = vshrl.u32 %v1900, 7
  %v1902 = vsub.s32 7, %v1901
  %v1903 = vrot.slane %v1602, %v1902
  %v1904 = vlaneseq
  %v1905 = vshrl.u32 %v1904, 7
  %v1906 = vsub.s32 7, %v1905
  %v1907 = vrot.slane %v1603, %v1906
  %v1908 = vlaneseq
  %v1909 = vshrl.u32 %v1908, 7
  %v1910 = vsub.s32 7, %v1909
  %v1911 = vrot.slane %v1604, %v1910
  %v1912 = vlaneseq
  %v1913 = vshrl.u32 %v1912, 7
  %v1914 = vsub.s32 7, %v1913
  %v1915 = vrot.slane %v1605, %v1914
  %v1916 = vmul.f32 %v1894, %v1903
  %v1917 = vmul.f32 %v1894, %v1907
  %v1918 = vmul.f32 %v1894, %v1911
  %v1919 = vmul.f32 %v1894, %v1915
  %v1920 = vmul.f32 %v1898, %v1903
  %v1921 = vmul.f32 %v1898, %v1907
  %v1922 = vmul.f32 %v1898, %v1911
  %v1923 = vmul.f32 %v1898, %v1915
  %v1924 = vadd.f32 %v1884, %v1916
  %v1925 = vadd.f32 %v1885, %v1917
  %v1926 = vadd.f32 %v1886, %v1918
  %v1927 = vadd.f32 %v1887, %v1919
  %v1928 = vadd.f32 %v1888, %v1920
  %v1929 = vadd.f32 %v1889, %v1921
  %v1930 = vadd.f32 %v1890, %v1922
  %v1931 = vadd.f32 %v1891, %v1923
  %1932 = vset.pattern.permute.xlu0 8
  %1933 = vperm.xlu0 %1932, %v1600
  %v1934 = vpop.permute.xlu0 %1933
  %1936 = vset.pattern.permute.xlu0 8
  %1937 = vperm.xlu0 %1936, %v1601
  %v1938 = vpop.permute.xlu0 %1937
  %v1940 = vlaneseq
  %v1941 = vshrl.u32 %v1940, 7
  %v1942 = vsub.s32 0, %v1941
  %v1943 = vrot.slane %v1606, %v1942
  %v1944 = vlaneseq
  %v1945 = vshrl.u32 %v1944, 7
  %v1946 = vsub.s32 0, %v1945
  %v1947 = vrot.slane %v1607, %v1946
  %v1948 = vlaneseq
  %v1949 = vshrl.u32 %v1948, 7
  %v1950 = vsub.s32 0, %v1949
  %v1951 = vrot.slane %v1608, %v1950
  %v1952 = vlaneseq
  %v1953 = vshrl.u32 %v1952, 7
  %v1954 = vsub.s32 0, %v1953
  %v1955 = vrot.slane %v1609, %v1954
  %v1956 = vmul.f32 %v1934, %v1943
  %v1957 = vmul.f32 %v1934, %v1947
  %v1958 = vmul.f32 %v1934, %v1951
  %v1959 = vmul.f32 %v1934, %v1955
  %v1960 = vmul.f32 %v1938, %v1943
  %v1961 = vmul.f32 %v1938, %v1947
  %v1962 = vmul.f32 %v1938, %v1951
  %v1963 = vmul.f32 %v1938, %v1955
  %v1964 = vadd.f32 %v1924, %v1956
  %v1965 = vadd.f32 %v1925, %v1957
  %v1966 = vadd.f32 %v1926, %v1958
  %v1967 = vadd.f32 %v1927, %v1959
  %v1968 = vadd.f32 %v1928, %v1960
  %v1969 = vadd.f32 %v1929, %v1961
  %v1970 = vadd.f32 %v1930, %v1962
  %v1971 = vadd.f32 %v1931, %v1963
  %1972 = vset.pattern.permute.xlu0 9
  %1973 = vperm.xlu0 %1972, %v1600
  %v1974 = vpop.permute.xlu0 %1973
  %1976 = vset.pattern.permute.xlu0 9
  %1977 = vperm.xlu0 %1976, %v1601
  %v1978 = vpop.permute.xlu0 %1977
  %v1980 = vlaneseq
  %v1981 = vshrl.u32 %v1980, 7
  %v1982 = vsub.s32 1, %v1981
  %v1983 = vrot.slane %v1606, %v1982
  %v1984 = vlaneseq
  %v1985 = vshrl.u32 %v1984, 7
  %v1986 = vsub.s32 1, %v1985
  %v1987 = vrot.slane %v1607, %v1986
  %v1988 = vlaneseq
  %v1989 = vshrl.u32 %v1988, 7
  %v1990 = vsub.s32 1, %v1989
  %v1991 = vrot.slane %v1608, %v1990
  %v1992 = vlaneseq
  %v1993 = vshrl.u32 %v1992, 7
  %v1994 = vsub.s32 1, %v1993
  %v1995 = vrot.slane %v1609, %v1994
  %v1996 = vmul.f32 %v1974, %v1983
  %v1997 = vmul.f32 %v1974, %v1987
  %v1998 = vmul.f32 %v1974, %v1991
  %v1999 = vmul.f32 %v1974, %v1995
  %v2000 = vmul.f32 %v1978, %v1983
  %v2001 = vmul.f32 %v1978, %v1987
  %v2002 = vmul.f32 %v1978, %v1991
  %v2003 = vmul.f32 %v1978, %v1995
  %v2004 = vadd.f32 %v1964, %v1996
  %v2005 = vadd.f32 %v1965, %v1997
  %v2006 = vadd.f32 %v1966, %v1998
  %v2007 = vadd.f32 %v1967, %v1999
  %v2008 = vadd.f32 %v1968, %v2000
  %v2009 = vadd.f32 %v1969, %v2001
  %v2010 = vadd.f32 %v1970, %v2002
  %v2011 = vadd.f32 %v1971, %v2003
  %v2012 = vmax.f32 %v2004, 0.0
  %v2013 = vmax.f32 %v2005, 0.0
  %v2014 = vmax.f32 %v2006, 0.0
  %v2015 = vmax.f32 %v2007, 0.0
  %v2016 = vmax.f32 %v2008, 0.0
  %v2017 = vmax.f32 %v2009, 0.0
  %v2018 = vmax.f32 %v2010, 0.0
  %v2019 = vmax.f32 %v2011, 0.0
  %v2020 = vpack.c.bf16 %v2016, %v2012
  %v2021 = vpack.c.bf16 %v2017, %v2013
  %v2022 = vpack.c.bf16 %v2018, %v2014
  %v2023 = vpack.c.bf16 %v2019, %v2015
  %v2024 = vld [vmem:[%s5] sm:$0xff]
  %v2025 = vld [vmem:[%s5 + $0x8] sm:$0xff]
  %v2026 = vld [vmem:[%s5 + $0x10] sm:$0xff]
  %v2027 = vld [vmem:[%s5 + $0x18] sm:$0xff]
  %v2028 = vld [vmem:[%s5 + $0x20] sm:$0xff]
  %v2029 = vld [vmem:[%s5 + $0x28] sm:$0xff]
  %v2030 = vld [vmem:[%s5 + $0x30] sm:$0xff]
  %v2031 = vld [vmem:[%s5 + $0x38] sm:$0xff]
  %v2032 = vld [vmem:[%s5 + $0x40] sm:$0xff]
  %v2033 = vld [vmem:[%s5 + $0x48] sm:$0xff]
  %v2034 = vld [vmem:[%s5 + $0x50] sm:$0xff]
  %v2035 = vld [vmem:[%s5 + $0x58] sm:$0xff]
  %v2036 = vld [vmem:[%s5 + $0x60] sm:$0xff]
  %v2037 = vld [vmem:[%s5 + $0x68] sm:$0xff]
  %v2038 = vld [vmem:[%s5 + $0x70] sm:$0xff]
  %v2039 = vld [vmem:[%s5 + $0x78] sm:$0xff]
  %v2040 = vld [vmem:[%s5 + $0x80] sm:$0xff]
  %v2041 = vld [vmem:[%s5 + $0x88] sm:$0xff]
  %v2042 = vld [vmem:[%s5 + $0x90] sm:$0xff]
  %v2043 = vld [vmem:[%s5 + $0x98] sm:$0xff]
  %v2044 = vld [vmem:[%s5 + $0xa0] sm:$0xff]
  %v2045 = vld [vmem:[%s5 + $0xa8] sm:$0xff]
  %v2046 = vld [vmem:[%s5 + $0xb0] sm:$0xff]
  %v2047 = vld [vmem:[%s5 + $0xb8] sm:$0xff]
  %v2048 = vld [vmem:[%s5 + $0xc0] sm:$0xff]
  %v2049 = vld [vmem:[%s5 + $0xc8] sm:$0xff]
  %v2050 = vld [vmem:[%s5 + $0xd0] sm:$0xff]
  %v2051 = vld [vmem:[%s5 + $0xd8] sm:$0xff]
  %v2052 = vld [vmem:[%s5 + $0xe0] sm:$0xff]
  %v2053 = vld [vmem:[%s5 + $0xe8] sm:$0xff]
  %v2054 = vld [vmem:[%s5 + $0xf0] sm:$0xff]
  %v2055 = vld [vmem:[%s5 + $0xf8] sm:$0xff]
  %v2056 = vld [vmem:[%s5 + $0x100] sm:$0xff]
  %v2057 = vld [vmem:[%s5 + $0x108] sm:$0xff]
  %v2058 = vld [vmem:[%s5 + $0x110] sm:$0xff]
  %v2059 = vld [vmem:[%s5 + $0x118] sm:$0xff]
  %v2060 = vld [vmem:[%s5 + $0x120] sm:$0xff]
  %v2061 = vld [vmem:[%s5 + $0x128] sm:$0xff]
  %v2062 = vld [vmem:[%s5 + $0x130] sm:$0xff]
  %v2063 = vld [vmem:[%s5 + $0x138] sm:$0xff]
  %v2064 = vld [vmem:[%s5 + $0x140] sm:$0xff]
  %v2065 = vld [vmem:[%s5 + $0x148] sm:$0xff]
  %v2066 = vld [vmem:[%s5 + $0x150] sm:$0xff]
  %v2067 = vld [vmem:[%s5 + $0x158] sm:$0xff]
  %v2068 = vld [vmem:[%s5 + $0x160] sm:$0xff]
  %v2069 = vld [vmem:[%s5 + $0x168] sm:$0xff]
  %v2070 = vld [vmem:[%s5 + $0x170] sm:$0xff]
  %v2071 = vld [vmem:[%s5 + $0x178] sm:$0xff]
  %v2072 = vld [vmem:[%s5 + $0x180] sm:$0xff]
  %v2073 = vld [vmem:[%s5 + $0x188] sm:$0xff]
  %v2074 = vld [vmem:[%s5 + $0x190] sm:$0xff]
  %v2075 = vld [vmem:[%s5 + $0x198] sm:$0xff]
  %v2076 = vld [vmem:[%s5 + $0x1a0] sm:$0xff]
  %v2077 = vld [vmem:[%s5 + $0x1a8] sm:$0xff]
  %v2078 = vld [vmem:[%s5 + $0x1b0] sm:$0xff]
  %v2079 = vld [vmem:[%s5 + $0x1b8] sm:$0xff]
  %v2080 = vld [vmem:[%s5 + $0x1c0] sm:$0xff]
  %v2081 = vld [vmem:[%s5 + $0x1c8] sm:$0xff]
  %v2082 = vld [vmem:[%s5 + $0x1d0] sm:$0xff]
  %v2083 = vld [vmem:[%s5 + $0x1d8] sm:$0xff]
  %v2084 = vld [vmem:[%s5 + $0x1e0] sm:$0xff]
  %v2085 = vld [vmem:[%s5 + $0x1e8] sm:$0xff]
  %v2086 = vld [vmem:[%s5 + $0x1f0] sm:$0xff]
  %v2087 = vld [vmem:[%s5 + $0x1f8] sm:$0xff]
  %v2088 = vld [vmem:[%s5 + $0x200] sm:$0xff]
  %v2089 = vld [vmem:[%s5 + $0x208] sm:$0xff]
  %v2090 = vld [vmem:[%s5 + $0x210] sm:$0xff]
  %v2091 = vld [vmem:[%s5 + $0x218] sm:$0xff]
  %v2092 = vld [vmem:[%s5 + $0x220] sm:$0xff]
  %v2093 = vld [vmem:[%s5 + $0x228] sm:$0xff]
  %v2094 = vld [vmem:[%s5 + $0x230] sm:$0xff]
  %v2095 = vld [vmem:[%s5 + $0x238] sm:$0xff]
  %v2096 = vld [vmem:[%s5 + $0x240] sm:$0xff]
  %v2097 = vld [vmem:[%s5 + $0x248] sm:$0xff]
  %v2098 = vld [vmem:[%s5 + $0x250] sm:$0xff]
  %v2099 = vld [vmem:[%s5 + $0x258] sm:$0xff]
  %v2100 = vld [vmem:[%s5 + $0x260] sm:$0xff]
  %v2101 = vld [vmem:[%s5 + $0x268] sm:$0xff]
  %v2102 = vld [vmem:[%s5 + $0x270] sm:$0xff]
  %v2103 = vld [vmem:[%s5 + $0x278] sm:$0xff]
  %v2104 = vld [vmem:[%s5 + $0x280] sm:$0xff]
  %v2105 = vld [vmem:[%s5 + $0x288] sm:$0xff]
  %v2106 = vld [vmem:[%s5 + $0x290] sm:$0xff]
  %v2107 = vld [vmem:[%s5 + $0x298] sm:$0xff]
  %v2108 = vld [vmem:[%s5 + $0x2a0] sm:$0xff]
  %v2109 = vld [vmem:[%s5 + $0x2a8] sm:$0xff]
  %v2110 = vld [vmem:[%s5 + $0x2b0] sm:$0xff]
  %v2111 = vld [vmem:[%s5 + $0x2b8] sm:$0xff]
  %v2112 = vld [vmem:[%s5 + $0x2c0] sm:$0xff]
  %v2113 = vld [vmem:[%s5 + $0x2c8] sm:$0xff]
  %v2114 = vld [vmem:[%s5 + $0x2d0] sm:$0xff]
  %v2115 = vld [vmem:[%s5 + $0x2d8] sm:$0xff]
  %v2116 = vld [vmem:[%s5 + $0x2e0] sm:$0xff]
  %v2117 = vld [vmem:[%s5 + $0x2e8] sm:$0xff]
  %v2118 = vld [vmem:[%s5 + $0x2f0] sm:$0xff]
  %v2119 = vld [vmem:[%s5 + $0x2f8] sm:$0xff]
  %v2120 = vld [vmem:[%s5 + $0x300] sm:$0xff]
  %v2121 = vld [vmem:[%s5 + $0x308] sm:$0xff]
  %v2122 = vld [vmem:[%s5 + $0x310] sm:$0xff]
  %v2123 = vld [vmem:[%s5 + $0x318] sm:$0xff]
  %v2124 = vld [vmem:[%s6] sm:$0xf]
  %v2126 = vlaneseq
  %v2127 = vshrl.u32 %v2126, 7
  %v2128 = vsub.s32 0, %v2127
  %v2129 = vrot.slane %v2124, %v2128
  %v2130 = vlaneseq
  %v2131 = vshrl.u32 %v2130, 7
  %v2132 = vsub.s32 1, %v2131
  %v2133 = vrot.slane %v2124, %v2132
  %v2134 = vlaneseq
  %v2135 = vshrl.u32 %v2134, 7
  %v2136 = vsub.s32 2, %v2135
  %v2137 = vrot.slane %v2124, %v2136
  %v2138 = vlaneseq
  %v2139 = vshrl.u32 %v2138, 7
  %v2140 = vsub.s32 3, %v2139
  %v2141 = vrot.slane %v2124, %v2140
  %v2246 = vunpack.c.l.b16 %v2024
  %v2247 = vunpack.c.h.b16 %v2024
  %v2248 = vunpack.c.l.b16 %v2025
  %v2249 = vunpack.c.h.b16 %v2025
  %v2250 = vunpack.c.l.b16 %v2026
  %v2251 = vunpack.c.h.b16 %v2026
  %v2252 = vunpack.c.l.b16 %v2027
  %v2253 = vunpack.c.h.b16 %v2027
  %v2254 = vunpack.c.l.b16 %v2028
  %v2255 = vunpack.c.h.b16 %v2028
  %v2256 = vunpack.c.l.b16 %v2029
  %v2257 = vunpack.c.h.b16 %v2029
  %v2258 = vunpack.c.l.b16 %v2030
  %v2259 = vunpack.c.h.b16 %v2030
  %v2260 = vunpack.c.l.b16 %v2031
  %v2261 = vunpack.c.h.b16 %v2031
  %v2262 = vunpack.c.l.b16 %v2032
  %v2263 = vunpack.c.h.b16 %v2032
  %v2264 = vunpack.c.l.b16 %v2033
  %v2265 = vunpack.c.h.b16 %v2033
  %v2266 = vunpack.c.l.b16 %v2034
  %v2267 = vunpack.c.h.b16 %v2034
  %v2268 = vunpack.c.l.b16 %v2035
  %v2269 = vunpack.c.h.b16 %v2035
  %v2270 = vunpack.c.l.b16 %v2036
  %v2271 = vunpack.c.h.b16 %v2036
  %v2272 = vunpack.c.l.b16 %v2037
  %v2273 = vunpack.c.h.b16 %v2037
  %v2274 = vunpack.c.l.b16 %v2038
  %v2275 = vunpack.c.h.b16 %v2038
  %v2276 = vunpack.c.l.b16 %v2039
  %v2277 = vunpack.c.h.b16 %v2039
  %v2278 = vunpack.c.l.b16 %v2040
  %v2279 = vunpack.c.h.b16 %v2040
  %v2280 = vunpack.c.l.b16 %v2041
  %v2281 = vunpack.c.h.b16 %v2041
  %v2282 = vunpack.c.l.b16 %v2042
  %v2283 = vunpack.c.h.b16 %v2042
  %v2284 = vunpack.c.l.b16 %v2043
  %v2285 = vunpack.c.h.b16 %v2043
  %v2286 = vunpack.c.l.b16 %v2044
  %v2287 = vunpack.c.h.b16 %v2044
  %v2288 = vunpack.c.l.b16 %v2045
  %v2289 = vunpack.c.h.b16 %v2045
  %v2290 = vunpack.c.l.b16 %v2046
  %v2291 = vunpack.c.h.b16 %v2046
  %v2292 = vunpack.c.l.b16 %v2047
  %v2293 = vunpack.c.h.b16 %v2047
  %v2294 = vunpack.c.l.b16 %v2048
  %v2295 = vunpack.c.h.b16 %v2048
  %v2296 = vunpack.c.l.b16 %v2049
  %v2297 = vunpack.c.h.b16 %v2049
  %v2298 = vunpack.c.l.b16 %v2050
  %v2299 = vunpack.c.h.b16 %v2050
  %v2300 = vunpack.c.l.b16 %v2051
  %v2301 = vunpack.c.h.b16 %v2051
  %v2302 = vunpack.c.l.b16 %v2052
  %v2303 = vunpack.c.h.b16 %v2052
  %v2304 = vunpack.c.l.b16 %v2053
  %v2305 = vunpack.c.h.b16 %v2053
  %v2306 = vunpack.c.l.b16 %v2054
  %v2307 = vunpack.c.h.b16 %v2054
  %v2308 = vunpack.c.l.b16 %v2055
  %v2309 = vunpack.c.h.b16 %v2055
  %v2310 = vunpack.c.l.b16 %v2056
  %v2311 = vunpack.c.h.b16 %v2056
  %v2312 = vunpack.c.l.b16 %v2057
  %v2313 = vunpack.c.h.b16 %v2057
  %v2314 = vunpack.c.l.b16 %v2058
  %v2315 = vunpack.c.h.b16 %v2058
  %v2316 = vunpack.c.l.b16 %v2059
  %v2317 = vunpack.c.h.b16 %v2059
  %v2318 = vunpack.c.l.b16 %v2060
  %v2319 = vunpack.c.h.b16 %v2060
  %v2320 = vunpack.c.l.b16 %v2061
  %v2321 = vunpack.c.h.b16 %v2061
  %v2322 = vunpack.c.l.b16 %v2062
  %v2323 = vunpack.c.h.b16 %v2062
  %v2324 = vunpack.c.l.b16 %v2063
  %v2325 = vunpack.c.h.b16 %v2063
  %v2326 = vunpack.c.l.b16 %v2064
  %v2327 = vunpack.c.h.b16 %v2064
  %v2328 = vunpack.c.l.b16 %v2065
  %v2329 = vunpack.c.h.b16 %v2065
  %v2330 = vunpack.c.l.b16 %v2066
  %v2331 = vunpack.c.h.b16 %v2066
  %v2332 = vunpack.c.l.b16 %v2067
  %v2333 = vunpack.c.h.b16 %v2067
  %v2334 = vunpack.c.l.b16 %v2068
  %v2335 = vunpack.c.h.b16 %v2068
  %v2336 = vunpack.c.l.b16 %v2069
  %v2337 = vunpack.c.h.b16 %v2069
  %v2338 = vunpack.c.l.b16 %v2070
  %v2339 = vunpack.c.h.b16 %v2070
  %v2340 = vunpack.c.l.b16 %v2071
  %v2341 = vunpack.c.h.b16 %v2071
  %v2342 = vunpack.c.l.b16 %v2072
  %v2343 = vunpack.c.h.b16 %v2072
  %v2344 = vunpack.c.l.b16 %v2073
  %v2345 = vunpack.c.h.b16 %v2073
  %v2346 = vunpack.c.l.b16 %v2074
  %v2347 = vunpack.c.h.b16 %v2074
  %v2348 = vunpack.c.l.b16 %v2075
  %v2349 = vunpack.c.h.b16 %v2075
  %v2350 = vunpack.c.l.b16 %v2076
  %v2351 = vunpack.c.h.b16 %v2076
  %v2352 = vunpack.c.l.b16 %v2077
  %v2353 = vunpack.c.h.b16 %v2077
  %v2354 = vunpack.c.l.b16 %v2078
  %v2355 = vunpack.c.h.b16 %v2078
  %v2356 = vunpack.c.l.b16 %v2079
  %v2357 = vunpack.c.h.b16 %v2079
  %v2358 = vunpack.c.l.b16 %v2080
  %v2359 = vunpack.c.h.b16 %v2080
  %v2360 = vunpack.c.l.b16 %v2081
  %v2361 = vunpack.c.h.b16 %v2081
  %v2362 = vunpack.c.l.b16 %v2082
  %v2363 = vunpack.c.h.b16 %v2082
  %v2364 = vunpack.c.l.b16 %v2083
  %v2365 = vunpack.c.h.b16 %v2083
  %v2366 = vunpack.c.l.b16 %v2084
  %v2367 = vunpack.c.h.b16 %v2084
  %v2368 = vunpack.c.l.b16 %v2085
  %v2369 = vunpack.c.h.b16 %v2085
  %v2370 = vunpack.c.l.b16 %v2086
  %v2371 = vunpack.c.h.b16 %v2086
  %v2372 = vunpack.c.l.b16 %v2087
  %v2373 = vunpack.c.h.b16 %v2087
  %v2374 = vunpack.c.l.b16 %v2088
  %v2375 = vunpack.c.h.b16 %v2088
  %v2376 = vunpack.c.l.b16 %v2089
  %v2377 = vunpack.c.h.b16 %v2089
  %v2378 = vunpack.c.l.b16 %v2090
  %v2379 = vunpack.c.h.b16 %v2090
  %v2380 = vunpack.c.l.b16 %v2091
  %v2381 = vunpack.c.h.b16 %v2091
  %v2382 = vunpack.c.l.b16 %v2092
  %v2383 = vunpack.c.h.b16 %v2092
  %v2384 = vunpack.c.l.b16 %v2093
  %v2385 = vunpack.c.h.b16 %v2093
  %v2386 = vunpack.c.l.b16 %v2094
  %v2387 = vunpack.c.h.b16 %v2094
  %v2388 = vunpack.c.l.b16 %v2095
  %v2389 = vunpack.c.h.b16 %v2095
  %v2390 = vunpack.c.l.b16 %v2096
  %v2391 = vunpack.c.h.b16 %v2096
  %v2392 = vunpack.c.l.b16 %v2097
  %v2393 = vunpack.c.h.b16 %v2097
  %v2394 = vunpack.c.l.b16 %v2098
  %v2395 = vunpack.c.h.b16 %v2098
  %v2396 = vunpack.c.l.b16 %v2099
  %v2397 = vunpack.c.h.b16 %v2099
  %v2398 = vunpack.c.l.b16 %v2100
  %v2399 = vunpack.c.h.b16 %v2100
  %v2400 = vunpack.c.l.b16 %v2101
  %v2401 = vunpack.c.h.b16 %v2101
  %v2402 = vunpack.c.l.b16 %v2102
  %v2403 = vunpack.c.h.b16 %v2102
  %v2404 = vunpack.c.l.b16 %v2103
  %v2405 = vunpack.c.h.b16 %v2103
  %v2406 = vunpack.c.l.b16 %v2104
  %v2407 = vunpack.c.h.b16 %v2104
  %v2408 = vunpack.c.l.b16 %v2105
  %v2409 = vunpack.c.h.b16 %v2105
  %v2410 = vunpack.c.l.b16 %v2106
  %v2411 = vunpack.c.h.b16 %v2106
  %v2412 = vunpack.c.l.b16 %v2107
  %v2413 = vunpack.c.h.b16 %v2107
  %v2414 = vunpack.c.l.b16 %v2108
  %v2415 = vunpack.c.h.b16 %v2108
  %v2416 = vunpack.c.l.b16 %v2109
  %v2417 = vunpack.c.h.b16 %v2109
  %v2418 = vunpack.c.l.b16 %v2110
  %v2419 = vunpack.c.h.b16 %v2110
  %v2420 = vunpack.c.l.b16 %v2111
  %v2421 = vunpack.c.h.b16 %v2111
  %v2422 = vunpack.c.l.b16 %v2112
  %v2423 = vunpack.c.h.b16 %v2112
  %v2424 = vunpack.c.l.b16 %v2113
  %v2425 = vunpack.c.h.b16 %v2113
  %v2426 = vunpack.c.l.b16 %v2114
  %v2427 = vunpack.c.h.b16 %v2114
  %v2428 = vunpack.c.l.b16 %v2115
  %v2429 = vunpack.c.h.b16 %v2115
  %v2430 = vunpack.c.l.b16 %v2116
  %v2431 = vunpack.c.h.b16 %v2116
  %v2432 = vunpack.c.l.b16 %v2117
  %v2433 = vunpack.c.h.b16 %v2117
  %v2434 = vunpack.c.l.b16 %v2118
  %v2435 = vunpack.c.h.b16 %v2118
  %v2436 = vunpack.c.l.b16 %v2119
  %v2437 = vunpack.c.h.b16 %v2119
  %v2438 = vunpack.c.l.b16 %v2120
  %v2439 = vunpack.c.h.b16 %v2120
  %v2440 = vunpack.c.l.b16 %v2121
  %v2441 = vunpack.c.h.b16 %v2121
  %v2442 = vunpack.c.l.b16 %v2122
  %v2443 = vunpack.c.h.b16 %v2122
  %v2444 = vunpack.c.l.b16 %v2123
  %v2445 = vunpack.c.h.b16 %v2123
  %v2446 = vpack.c.b16 %v2250, %v2246
  %v2447 = vpack.c.b16 %v2251, %v2247
  %v2448 = vpack.c.b16 %v2252, %v2248
  %v2449 = vpack.c.b16 %v2253, %v2249
  %v2450 = vpack.c.b16 %v2258, %v2254
  %v2451 = vpack.c.b16 %v2259, %v2255
  %v2452 = vpack.c.b16 %v2260, %v2256
  %v2453 = vpack.c.b16 %v2261, %v2257
  %v2454 = vpack.c.b16 %v2266, %v2262
  %v2455 = vpack.c.b16 %v2267, %v2263
  %v2456 = vpack.c.b16 %v2268, %v2264
  %v2457 = vpack.c.b16 %v2269, %v2265
  %v2458 = vpack.c.b16 %v2274, %v2270
  %v2459 = vpack.c.b16 %v2275, %v2271
  %v2460 = vpack.c.b16 %v2276, %v2272
  %v2461 = vpack.c.b16 %v2277, %v2273
  %v2462 = vpack.c.b16 %v2282, %v2278
  %v2463 = vpack.c.b16 %v2283, %v2279
  %v2464 = vpack.c.b16 %v2284, %v2280
  %v2465 = vpack.c.b16 %v2285, %v2281
  %v2466 = vpack.c.b16 %v2290, %v2286
  %v2467 = vpack.c.b16 %v2291, %v2287
  %v2468 = vpack.c.b16 %v2292, %v2288
  %v2469 = vpack.c.b16 %v2293, %v2289
  %v2470 = vpack.c.b16 %v2298, %v2294
  %v2471 = vpack.c.b16 %v2299, %v2295
  %v2472 = vpack.c.b16 %v2300, %v2296
  %v2473 = vpack.c.b16 %v2301, %v2297
  %v2474 = vpack.c.b16 %v2306, %v2302
  %v2475 = vpack.c.b16 %v2307, %v2303
  %v2476 = vpack.c.b16 %v2308, %v2304
  %v2477 = vpack.c.b16 %v2309, %v2305
  %v2478 = vpack.c.b16 %v2314, %v2310
  %v2479 = vpack.c.b16 %v2315, %v2311
  %v2480 = vpack.c.b16 %v2316, %v2312
  %v2481 = vpack.c.b16 %v2317, %v2313
  %v2482 = vpack.c.b16 %v2322, %v2318
  %v2483 = vpack.c.b16 %v2323, %v2319
  %v2484 = vpack.c.b16 %v2324, %v2320
  %v2485 = vpack.c.b16 %v2325, %v2321
  %v2486 = vpack.c.b16 %v2330, %v2326
  %v2487 = vpack.c.b16 %v2331, %v2327
  %v2488 = vpack.c.b16 %v2332, %v2328
  %v2489 = vpack.c.b16 %v2333, %v2329
  %v2490 = vpack.c.b16 %v2338, %v2334
  %v2491 = vpack.c.b16 %v2339, %v2335
  %v2492 = vpack.c.b16 %v2340, %v2336
  %v2493 = vpack.c.b16 %v2341, %v2337
  %v2494 = vpack.c.b16 %v2346, %v2342
  %v2495 = vpack.c.b16 %v2347, %v2343
  %v2496 = vpack.c.b16 %v2348, %v2344
  %v2497 = vpack.c.b16 %v2349, %v2345
  %v2498 = vpack.c.b16 %v2354, %v2350
  %v2499 = vpack.c.b16 %v2355, %v2351
  %v2500 = vpack.c.b16 %v2356, %v2352
  %v2501 = vpack.c.b16 %v2357, %v2353
  %v2502 = vpack.c.b16 %v2362, %v2358
  %v2503 = vpack.c.b16 %v2363, %v2359
  %v2504 = vpack.c.b16 %v2364, %v2360
  %v2505 = vpack.c.b16 %v2365, %v2361
  %v2506 = vpack.c.b16 %v2370, %v2366
  %v2507 = vpack.c.b16 %v2371, %v2367
  %v2508 = vpack.c.b16 %v2372, %v2368
  %v2509 = vpack.c.b16 %v2373, %v2369
  %v2510 = vpack.c.b16 %v2378, %v2374
  %v2511 = vpack.c.b16 %v2379, %v2375
  %v2512 = vpack.c.b16 %v2380, %v2376
  %v2513 = vpack.c.b16 %v2381, %v2377
  %v2514 = vpack.c.b16 %v2386, %v2382
  %v2515 = vpack.c.b16 %v2387, %v2383
  %v2516 = vpack.c.b16 %v2388, %v2384
  %v2517 = vpack.c.b16 %v2389, %v2385
  %v2518 = vpack.c.b16 %v2394, %v2390
  %v2519 = vpack.c.b16 %v2395, %v2391
  %v2520 = vpack.c.b16 %v2396, %v2392
  %v2521 = vpack.c.b16 %v2397, %v2393
  %v2522 = vpack.c.b16 %v2402, %v2398
  %v2523 = vpack.c.b16 %v2403, %v2399
  %v2524 = vpack.c.b16 %v2404, %v2400
  %v2525 = vpack.c.b16 %v2405, %v2401
  %v2526 = vpack.c.b16 %v2410, %v2406
  %v2527 = vpack.c.b16 %v2411, %v2407
  %v2528 = vpack.c.b16 %v2412, %v2408
  %v2529 = vpack.c.b16 %v2413, %v2409
  %v2530 = vpack.c.b16 %v2418, %v2414
  %v2531 = vpack.c.b16 %v2419, %v2415
  %v2532 = vpack.c.b16 %v2420, %v2416
  %v2533 = vpack.c.b16 %v2421, %v2417
  %v2534 = vpack.c.b16 %v2426, %v2422
  %v2535 = vpack.c.b16 %v2427, %v2423
  %v2536 = vpack.c.b16 %v2428, %v2424
  %v2537 = vpack.c.b16 %v2429, %v2425
  %v2538 = vpack.c.b16 %v2434, %v2430
  %v2539 = vpack.c.b16 %v2435, %v2431
  %v2540 = vpack.c.b16 %v2436, %v2432
  %v2541 = vpack.c.b16 %v2437, %v2433
  %v2542 = vpack.c.b16 %v2442, %v2438
  %v2543 = vpack.c.b16 %v2443, %v2439
  %v2544 = vpack.c.b16 %v2444, %v2440
  %v2545 = vpack.c.b16 %v2445, %v2441
  %v2647 = vsel %vm1252, %v2023, 0
  %2649 = vmatprep.subr.bf16.mxu0 %v2475
  %2650 = vmatpush1.bf16.msra.mxu0 %v2474
  %2651 = vmatprep.subr.bf16.mxu0 %v2471
  %2652 = vmatpush1.bf16.msra.mxu0 %v2470
  %2653 = vmatprep.subr.bf16.mxu0 %v2467
  %2654 = vmatpush1.bf16.msra.mxu0 %v2466
  %2655 = vmatprep.subr.bf16.mxu0 %v2463
  %2656 = vmatpush1.bf16.msra.mxu0 %v2462
  %2657 = vmatprep.subr.bf16.mxu0 %v2459
  %2658 = vmatpush1.bf16.msra.mxu0 %v2458
  %2659 = vmatprep.subr.bf16.mxu0 %v2455
  %2660 = vmatpush1.bf16.msra.mxu0 %v2454
  %2661 = vmatprep.subr.bf16.mxu0 %v2451
  %2662 = vmatpush1.bf16.msra.mxu0 %v2450
  %2663 = vmatprep.subr.bf16.mxu0 %v2447
  %2664 = vmatpush1.bf16.msra.mxu0 %v2446
  %2665 = vmatprep.subr.bf16.mxu0 %v2507
  %2666 = vmatpush2.bf16.msra.mxu0 %v2506
  %2667 = vmatprep.subr.bf16.mxu0 %v2503
  %2668 = vmatpush2.bf16.msra.mxu0 %v2502
  %2669 = vmatprep.subr.bf16.mxu0 %v2499
  %2670 = vmatpush2.bf16.msra.mxu0 %v2498
  %2671 = vmatprep.subr.bf16.mxu0 %v2495
  %2672 = vmatpush2.bf16.msra.mxu0 %v2494
  %2673 = vmatprep.subr.bf16.mxu0 %v2491
  %2674 = vmatpush2.bf16.msra.mxu0 %v2490
  %2675 = vmatprep.subr.bf16.mxu0 %v2487
  %2676 = vmatpush2.bf16.msra.mxu0 %v2486
  %2677 = vmatprep.subr.bf16.mxu0 %v2483
  %2678 = vmatpush2.bf16.msra.mxu0 %v2482
  %2679 = vmatprep.subr.bf16.mxu0 %v2479
  %2680 = vmatpush2.bf16.msra.mxu0 %v2478
  %2681 = vmatprep.mubr.bf16.mxu0 %v2021
  %2682 = vmatmul.mubr.bf16.gmra.mxu0 %v2020
  %v2683 = vpop.f32.mrf.mxu0
  %v2684 = vadd.f32 %v2129, %v2683
  %v2685 = vpop.f32.mrf.mxu0
  %v2686 = vadd.f32 %v2133, %v2685
  %v2687 = vpop.f32.mrf.mxu0
  %v2688 = vadd.f32 %v2129, %v2687
  %v2689 = vpop.f32.mrf.mxu0
  %v2690 = vadd.f32 %v2133, %v2689
  %2691 = vdwg.mxu0
  %2692 = vmatprep.subr.bf16.mxu0 %v2539
  %2693 = vmatpush1.bf16.msra.mxu0 %v2538
  %2694 = vmatprep.subr.bf16.mxu0 %v2535
  %2695 = vmatpush1.bf16.msra.mxu0 %v2534
  %2696 = vmatprep.subr.bf16.mxu0 %v2531
  %2697 = vmatpush1.bf16.msra.mxu0 %v2530
  %2698 = vmatprep.subr.bf16.mxu0 %v2527
  %2699 = vmatpush1.bf16.msra.mxu0 %v2526
  %2700 = vmatprep.subr.bf16.mxu0 %v2523
  %2701 = vmatpush1.bf16.msra.mxu0 %v2522
  %2702 = vmatprep.subr.bf16.mxu0 %v2519
  %2703 = vmatpush1.bf16.msra.mxu0 %v2518
  %2704 = vmatprep.subr.bf16.mxu0 %v2515
  %2705 = vmatpush1.bf16.msra.mxu0 %v2514
  %2706 = vmatprep.subr.bf16.mxu0 %v2511
  %2707 = vmatpush1.bf16.msra.mxu0 %v2510
  %2708 = vmatprep.subr.bf16.mxu0 0
  %2709 = vmatpush2.bf16.msra.mxu0 0
  %2710 = vmatprep.subr.bf16.mxu0 0
  %2711 = vmatpush2.bf16.msra.mxu0 0
  %2712 = vmatprep.subr.bf16.mxu0 0
  %2713 = vmatpush2.bf16.msra.mxu0 0
  %2714 = vmatprep.subr.bf16.mxu0 0
  %2715 = vmatpush2.bf16.msra.mxu0 0
  %2716 = vmatprep.subr.bf16.mxu0 0
  %2717 = vmatpush2.bf16.msra.mxu0 0
  %2718 = vmatprep.subr.bf16.mxu0 0
  %2719 = vmatpush2.bf16.msra.mxu0 0
  %2720 = vmatprep.subr.bf16.mxu0 0
  %2721 = vmatpush2.bf16.msra.mxu0 0
  %2722 = vmatprep.subr.bf16.mxu0 %v2543
  %2723 = vmatpush2.bf16.msra.mxu0 %v2542
  %2724 = vmatprep.mubr.bf16.mxu0 %v2647
  %2725 = vmatmul.mubr.bf16.gmra.mxu0 %v2022
  %v2726 = vpop.f32.mrf.mxu0
  %v2727 = vadd.f32 %v2684, %v2726
  %v2728 = vpop.f32.mrf.mxu0
  %v2729 = vadd.f32 %v2686, %v2728
  %v2730 = vpop.f32.mrf.mxu0
  %v2731 = vadd.f32 %v2688, %v2730
  %v2732 = vpop.f32.mrf.mxu0
  %v2733 = vadd.f32 %v2690, %v2732
  %2734 = vdwg.mxu0
  %2735 = vmatprep.subr.bf16.mxu0 %v2477
  %2736 = vmatpush1.bf16.msra.mxu0 %v2476
  %2737 = vmatprep.subr.bf16.mxu0 %v2473
  %2738 = vmatpush1.bf16.msra.mxu0 %v2472
  %2739 = vmatprep.subr.bf16.mxu0 %v2469
  %2740 = vmatpush1.bf16.msra.mxu0 %v2468
  %2741 = vmatprep.subr.bf16.mxu0 %v2465
  %2742 = vmatpush1.bf16.msra.mxu0 %v2464
  %2743 = vmatprep.subr.bf16.mxu0 %v2461
  %2744 = vmatpush1.bf16.msra.mxu0 %v2460
  %2745 = vmatprep.subr.bf16.mxu0 %v2457
  %2746 = vmatpush1.bf16.msra.mxu0 %v2456
  %2747 = vmatprep.subr.bf16.mxu0 %v2453
  %2748 = vmatpush1.bf16.msra.mxu0 %v2452
  %2749 = vmatprep.subr.bf16.mxu0 %v2449
  %2750 = vmatpush1.bf16.msra.mxu0 %v2448
  %2751 = vmatprep.subr.bf16.mxu0 %v2509
  %2752 = vmatpush2.bf16.msra.mxu0 %v2508
  %2753 = vmatprep.subr.bf16.mxu0 %v2505
  %2754 = vmatpush2.bf16.msra.mxu0 %v2504
  %2755 = vmatprep.subr.bf16.mxu0 %v2501
  %2756 = vmatpush2.bf16.msra.mxu0 %v2500
  %2757 = vmatprep.subr.bf16.mxu0 %v2497
  %2758 = vmatpush2.bf16.msra.mxu0 %v2496
  %2759 = vmatprep.subr.bf16.mxu0 %v2493
  %2760 = vmatpush2.bf16.msra.mxu0 %v2492
  %2761 = vmatprep.subr.bf16.mxu0 %v2489
  %2762 = vmatpush2.bf16.msra.mxu0 %v2488
  %2763 = vmatprep.subr.bf16.mxu0 %v2485
  %2764 = vmatpush2.bf16.msra.mxu0 %v2484
  %2765 = vmatprep.subr.bf16.mxu0 %v2481
  %2766 = vmatpush2.bf16.msra.mxu0 %v2480
  %2767 = vmatprep.mubr.bf16.mxu0 %v2021
  %2768 = vmatmul.mubr.bf16.gmra.mxu0 %v2020
  %v2769 = vpop.f32.mrf.mxu0
  %v2770 = vadd.f32 %v2137, %v2769
  %v2771 = vpop.f32.mrf.mxu0
  %v2772 = vadd.f32 %v2141, %v2771
  %v2773 = vpop.f32.mrf.mxu0
  %v2774 = vadd.f32 %v2137, %v2773
  %v2775 = vpop.f32.mrf.mxu0
  %v2776 = vadd.f32 %v2141, %v2775
  %2777 = vdwg.mxu0
  %2778 = vmatprep.subr.bf16.mxu0 %v2541
  %2779 = vmatpush1.bf16.msra.mxu0 %v2540
  %2780 = vmatprep.subr.bf16.mxu0 %v2537
  %2781 = vmatpush1.bf16.msra.mxu0 %v2536
  %2782 = vmatprep.subr.bf16.mxu0 %v2533
  %2783 = vmatpush1.bf16.msra.mxu0 %v2532
  %2784 = vmatprep.subr.bf16.mxu0 %v2529
  %2785 = vmatpush1.bf16.msra.mxu0 %v2528
  %2786 = vmatprep.subr.bf16.mxu0 %v2525
  %2787 = vmatpush1.bf16.msra.mxu0 %v2524
  %2788 = vmatprep.subr.bf16.mxu0 %v2521
  %2789 = vmatpush1.bf16.msra.mxu0 %v2520
  %2790 = vmatprep.subr.bf16.mxu0 %v2517
  %2791 = vmatpush1.bf16.msra.mxu0 %v2516
  %2792 = vmatprep.subr.bf16.mxu0 %v2513
  %2793 = vmatpush1.bf16.msra.mxu0 %v2512
  %2794 = vmatprep.subr.bf16.mxu0 0
  %2795 = vmatpush2.bf16.msra.mxu0 0
  %2796 = vmatprep.subr.bf16.mxu0 0
  %2797 = vmatpush2.bf16.msra.mxu0 0
  %2798 = vmatprep.subr.bf16.mxu0 0
  %2799 = vmatpush2.bf16.msra.mxu0 0
  %2800 = vmatprep.subr.bf16.mxu0 0
  %2801 = vmatpush2.bf16.msra.mxu0 0
  %2802 = vmatprep.subr.bf16.mxu0 0
  %2803 = vmatpush2.bf16.msra.mxu0 0
  %2804 = vmatprep.subr.bf16.mxu0 0
  %2805 = vmatpush2.bf16.msra.mxu0 0
  %2806 = vmatprep.subr.bf16.mxu0 0
  %2807 = vmatpush2.bf16.msra.mxu0 0
  %2808 = vmatprep.subr.bf16.mxu0 %v2545
  %2809 = vmatpush2.bf16.msra.mxu0 %v2544
  %2810 = vmatprep.mubr.bf16.mxu0 %v2647
  %2811 = vmatmul.mubr.bf16.gmra.mxu0 %v2022
  %v2812 = vpop.f32.mrf.mxu0
  %v2813 = vadd.f32 %v2770, %v2812
  %v2814 = vpop.f32.mrf.mxu0
  %v2815 = vadd.f32 %v2772, %v2814
  %v2816 = vpop.f32.mrf.mxu0
  %v2817 = vadd.f32 %v2774, %v2816
  %v2818 = vpop.f32.mrf.mxu0
  %v2819 = vadd.f32 %v2776, %v2818
  %2820 = vdwg.mxu0
  %v2821 = vmax.f32 %v2727, 0.0
  %v2822 = vmax.f32 %v2729, 0.0
  %v2823 = vmax.f32 %v2813, 0.0
  %v2824 = vmax.f32 %v2815, 0.0
  %v2825 = vmax.f32 %v2731, 0.0
  %v2826 = vmax.f32 %v2733, 0.0
  %v2827 = vmax.f32 %v2817, 0.0
  %v2828 = vmax.f32 %v2819, 0.0
  %v2829 = vpack.c.bf16 %v2825, %v2821
  %v2830 = vpack.c.bf16 %v2826, %v2822
  %v2831 = vpack.c.bf16 %v2827, %v2823
  %v2832 = vpack.c.bf16 %v2828, %v2824
  %v2833 = vld [vmem:[%s7] sm:$0xf]
  %v2834 = vld [vmem:[%s7 + $0x4] sm:$0xf]
  %v2835 = vld [vmem:[%s7 + $0x8] sm:$0xf]
  %v2836 = vld [vmem:[%s7 + $0xc] sm:$0xf]
  %v2837 = vld [vmem:[%s7 + $0x10] sm:$0xf]
  %v2838 = vld [vmem:[%s7 + $0x14] sm:$0xf]
  %v2839 = vld [vmem:[%s7 + $0x18] sm:$0xf]
  %v2840 = vld [vmem:[%s7 + $0x1c] sm:$0xf]
  %v2841 = vld [vmem:[%s7 + $0x20] sm:$0xf]
  %v2842 = vld [vmem:[%s7 + $0x24] sm:$0xf]
  %v2843 = vld [vmem:[%s7 + $0x28] sm:$0xf]
  %v2844 = vld [vmem:[%s7 + $0x2c] sm:$0xf]
  %v2845 = vld [vmem:[%s7 + $0x30] sm:$0xf]
  %v2846 = vld [vmem:[%s7 + $0x34] sm:$0xf]
  %v2847 = vld [vmem:[%s7 + $0x38] sm:$0xf]
  %v2848 = vld [vmem:[%s7 + $0x3c] sm:$0xf]
  %v2849 = vld [vmem:[%s7 + $0x40] sm:$0xf]
  %v2850 = vld [vmem:[%s7 + $0x44] sm:$0xf]
  %v2851 = vld [vmem:[%s7 + $0x48] sm:$0xf]
  %v2852 = vld [vmem:[%s7 + $0x4c] sm:$0xf]
  %v2853 = vld [vmem:[%s7 + $0x50] sm:$0xf]
  %v2854 = vld [vmem:[%s7 + $0x54] sm:$0xf]
  %v2855 = vld [vmem:[%s7 + $0x58] sm:$0xf]
  %v2856 = vld [vmem:[%s7 + $0x5c] sm:$0xf]
  %v2857 = vld [vmem:[%s7 + $0x60] sm:$0xf]
  %v2858 = vld [vmem:[%s7 + $0x64] sm:$0xf]
  %v2859 = vld [vmem:[%s7 + $0x68] sm:$0xf]
  %v2860 = vld [vmem:[%s7 + $0x6c] sm:$0xf]
  %v2861 = vld [vmem:[%s7 + $0x70] sm:$0xf]
  %v2862 = vld [vmem:[%s7 + $0x74] sm:$0xf]
  %v2863 = vld [vmem:[%s7 + $0x78] sm:$0xf]
  %v2864 = vld [vmem:[%s7 + $0x7c] sm:$0xf]
  %v2865 = vld [vmem:[%s7 + $0x80] sm:$0xf]
  %v2866 = vld [vmem:[%s7 + $0x84] sm:$0xf]
  %v2867 = vld [vmem:[%s7 + $0x88] sm:$0xf]
  %v2868 = vld [vmem:[%s7 + $0x8c] sm:$0xf]
  %v2869 = vld [vmem:[%s7 + $0x90] sm:$0xf]
  %v2870 = vld [vmem:[%s7 + $0x94] sm:$0xf]
  %v2871 = vld [vmem:[%s7 + $0x98] sm:$0xf]
  %v2872 = vld [vmem:[%s7 + $0x9c] sm:$0xf]
  %v2873 = vld [vmem:[%s7 + $0xa0] sm:$0xf]
  %v2874 = vld [vmem:[%s7 + $0xa4] sm:$0xf]
  %v2875 = vld [vmem:[%s7 + $0xa8] sm:$0xf]
  %v2876 = vld [vmem:[%s7 + $0xac] sm:$0xf]
  %v2877 = vld [vmem:[%s7 + $0xb0] sm:$0xf]
  %v2878 = vld [vmem:[%s7 + $0xb4] sm:$0xf]
  %v2879 = vld [vmem:[%s7 + $0xb8] sm:$0xf]
  %v2880 = vld [vmem:[%s7 + $0xbc] sm:$0xf]
  %v2881 = vld [vmem:[%s7 + $0xc0] sm:$0xf]
  %v2882 = vld [vmem:[%s7 + $0xc4] sm:$0xf]
  %v2883 = vld [vmem:[%s8] sm:$0x1]
  %v2885 = vlaneseq
  %v2886 = vshrl.u32 %v2885, 7
  %v2887 = vsub.s32 0, %v2886
  %v2888 = vrot.slane %v2883, %v2887
  %v2940 = vunpack.c.l.b16 %v2833
  %v2941 = vunpack.c.l.b16 %v2834
  %v2942 = vunpack.c.l.b16 %v2835
  %v2943 = vunpack.c.l.b16 %v2836
  %v2944 = vunpack.c.l.b16 %v2837
  %v2945 = vunpack.c.l.b16 %v2838
  %v2946 = vunpack.c.l.b16 %v2839
  %v2947 = vunpack.c.l.b16 %v2840
  %v2948 = vunpack.c.l.b16 %v2841
  %v2949 = vunpack.c.l.b16 %v2842
  %v2950 = vunpack.c.l.b16 %v2843
  %v2951 = vunpack.c.l.b16 %v2844
  %v2952 = vunpack.c.l.b16 %v2845
  %v2953 = vunpack.c.l.b16 %v2846
  %v2954 = vunpack.c.l.b16 %v2847
  %v2955 = vunpack.c.l.b16 %v2848
  %v2956 = vunpack.c.l.b16 %v2849
  %v2957 = vunpack.c.l.b16 %v2850
  %v2958 = vunpack.c.l.b16 %v2851
  %v2959 = vunpack.c.l.b16 %v2852
  %v2960 = vunpack.c.l.b16 %v2853
  %v2961 = vunpack.c.l.b16 %v2854
  %v2962 = vunpack.c.l.b16 %v2855
  %v2963 = vunpack.c.l.b16 %v2856
  %v2964 = vunpack.c.l.b16 %v2857
  %v2965 = vunpack.c.l.b16 %v2858
  %v2966 = vunpack.c.l.b16 %v2859
  %v2967 = vunpack.c.l.b16 %v2860
  %v2968 = vunpack.c.l.b16 %v2861
  %v2969 = vunpack.c.l.b16 %v2862
  %v2970 = vunpack.c.l.b16 %v2863
  %v2971 = vunpack.c.l.b16 %v2864
  %v2972 = vunpack.c.l.b16 %v2865
  %v2973 = vunpack.c.l.b16 %v2866
  %v2974 = vunpack.c.l.b16 %v2867
  %v2975 = vunpack.c.l.b16 %v2868
  %v2976 = vunpack.c.l.b16 %v2869
  %v2977 = vunpack.c.l.b16 %v2870
  %v2978 = vunpack.c.l.b16 %v2871
  %v2979 = vunpack.c.l.b16 %v2872
  %v2980 = vunpack.c.l.b16 %v2873
  %v2981 = vunpack.c.l.b16 %v2874
  %v2982 = vunpack.c.l.b16 %v2875
  %v2983 = vunpack.c.l.b16 %v2876
  %v2984 = vunpack.c.l.b16 %v2877
  %v2985 = vunpack.c.l.b16 %v2878
  %v2986 = vunpack.c.l.b16 %v2879
  %v2987 = vunpack.c.l.b16 %v2880
  %v2988 = vunpack.c.l.b16 %v2881
  %v2989 = vunpack.c.l.b16 %v2882
  %v2990 = vpack.c.b16 %v2941, %v2940
  %v2991 = vpack.c.b16 %v2943, %v2942
  %v2992 = vpack.c.b16 %v2945, %v2944
  %v2993 = vpack.c.b16 %v2947, %v2946
  %v2994 = vpack.c.b16 %v2949, %v2948
  %v2995 = vpack.c.b16 %v2951, %v2950
  %v2996 = vpack.c.b16 %v2953, %v2952
  %v2997 = vpack.c.b16 %v2955, %v2954
  %v2998 = vpack.c.b16 %v2957, %v2956
  %v2999 = vpack.c.b16 %v2959, %v2958
  %v3000 = vpack.c.b16 %v2961, %v2960
  %v3001 = vpack.c.b16 %v2963, %v2962
  %v3002 = vpack.c.b16 %v2965, %v2964
  %v3003 = vpack.c.b16 %v2967, %v2966
  %v3004 = vpack.c.b16 %v2969, %v2968
  %v3005 = vpack.c.b16 %v2971, %v2970
  %v3006 = vpack.c.b16 %v2973, %v2972
  %v3007 = vpack.c.b16 %v2975, %v2974
  %v3008 = vpack.c.b16 %v2977, %v2976
  %v3009 = vpack.c.b16 %v2979, %v2978
  %v3010 = vpack.c.b16 %v2981, %v2980
  %v3011 = vpack.c.b16 %v2983, %v2982
  %v3012 = vpack.c.b16 %v2985, %v2984
  %v3013 = vpack.c.b16 %v2987, %v2986
  %v3014 = vpack.c.b16 %v2989, %v2988
  %v3041 = vsel %vm1252, %v2832, 0
  %3043 = vmatprep.subr.bf16.mxu0 0
  %3044 = vmatpush1.bf16.msra.mxu0 %v2997
  %3045 = vmatprep.subr.bf16.mxu0 0
  %3046 = vmatpush1.bf16.msra.mxu0 %v2996
  %3047 = vmatprep.subr.bf16.mxu0 0
  %3048 = vmatpush1.bf16.msra.mxu0 %v2995
  %3049 = vmatprep.subr.bf16.mxu0 0
  %3050 = vmatpush1.bf16.msra.mxu0 %v2994
  %3051 = vmatprep.subr.bf16.mxu0 0
  %3052 = vmatpush1.bf16.msra.mxu0 %v2993
  %3053 = vmatprep.subr.bf16.mxu0 0
  %3054 = vmatpush1.bf16.msra.mxu0 %v2992
  %3055 = vmatprep.subr.bf16.mxu0 0
  %3056 = vmatpush1.bf16.msra.mxu0 %v2991
  %3057 = vmatprep.subr.bf16.mxu0 0
  %3058 = vmatpush1.bf16.msra.mxu0 %v2990
  %3059 = vmatprep.subr.bf16.mxu0 0
  %3060 = vmatpush2.bf16.msra.mxu0 %v3005
  %3061 = vmatprep.subr.bf16.mxu0 0
  %3062 = vmatpush2.bf16.msra.mxu0 %v3004
  %3063 = vmatprep.subr.bf16.mxu0 0
  %3064 = vmatpush2.bf16.msra.mxu0 %v3003
  %3065 = vmatprep.subr.bf16.mxu0 0
  %3066 = vmatpush2.bf16.msra.mxu0 %v3002
  %3067 = vmatprep.subr.bf16.mxu0 0
  %3068 = vmatpush2.bf16.msra.mxu0 %v3001
  %3069 = vmatprep.subr.bf16.mxu0 0
  %3070 = vmatpush2.bf16.msra.mxu0 %v3000
  %3071 = vmatprep.subr.bf16.mxu0 0
  %3072 = vmatpush2.bf16.msra.mxu0 %v2999
  %3073 = vmatprep.subr.bf16.mxu0 0
  %3074 = vmatpush2.bf16.msra.mxu0 %v2998
  %3075 = vmatprep.mubr.bf16.mxu0 %v2830
  %3076 = vmatmul.mubr.bf16.gmra.mxu0 %v2829
  %v3077 = vpop.f32.mrf.mxu0
  %v3078 = vadd.f32 %v2888, %v3077
  %v3079 = vpop.f32.mrf.mxu0
  %v3080 = vpop.f32.mrf.mxu0
  %v3081 = vadd.f32 %v2888, %v3080
  %v3082 = vpop.f32.mrf.mxu0
  %3083 = vdwg.mxu0
  %3084 = vmatprep.subr.bf16.mxu0 0
  %3085 = vmatpush1.bf16.msra.mxu0 %v3013
  %3086 = vmatprep.subr.bf16.mxu0 0
  %3087 = vmatpush1.bf16.msra.mxu0 %v3012
  %3088 = vmatprep.subr.bf16.mxu0 0
  %3089 = vmatpush1.bf16.msra.mxu0 %v3011
  %3090 = vmatprep.subr.bf16.mxu0 0
  %3091 = vmatpush1.bf16.msra.mxu0 %v3010
  %3092 = vmatprep.subr.bf16.mxu0 0
  %3093 = vmatpush1.bf16.msra.mxu0 %v3009
  %3094 = vmatprep.subr.bf16.mxu0 0
  %3095 = vmatpush1.bf16.msra.mxu0 %v3008
  %3096 = vmatprep.subr.bf16.mxu0 0
  %3097 = vmatpush1.bf16.msra.mxu0 %v3007
  %3098 = vmatprep.subr.bf16.mxu0 0
  %3099 = vmatpush1.bf16.msra.mxu0 %v3006
  %3100 = vmatprep.subr.bf16.mxu0 0
  %3101 = vmatpush2.bf16.msra.mxu0 0
  %3102 = vmatprep.subr.bf16.mxu0 0
  %3103 = vmatpush2.bf16.msra.mxu0 0
  %3104 = vmatprep.subr.bf16.mxu0 0
  %3105 = vmatpush2.bf16.msra.mxu0 0
  %3106 = vmatprep.subr.bf16.mxu0 0
  %3107 = vmatpush2.bf16.msra.mxu0 0
  %3108 = vmatprep.subr.bf16.mxu0 0
  %3109 = vmatpush2.bf16.msra.mxu0 0
  %3110 = vmatprep.subr.bf16.mxu0 0
  %3111 = vmatpush2.bf16.msra.mxu0 0
  %3112 = vmatprep.subr.bf16.mxu0 0
  %3113 = vmatpush2.bf16.msra.mxu0 0
  %3114 = vmatprep.subr.bf16.mxu0 0
  %3115 = vmatpush2.bf16.msra.mxu0 %v3014
  %3116 = vmatprep.mubr.bf16.mxu0 %v3041
  %3117 = vmatmul.mubr.bf16.gmra.mxu0 %v2831
  %v3118 = vpop.f32.mrf.mxu0
  %v3119 = vadd.f32 %v3078, %v3118
  %v3120 = vpop.f32.mrf.mxu0
  %v3121 = vpop.f32.mrf.mxu0
  %v3122 = vadd.f32 %v3081, %v3121
  %v3123 = vpop.f32.mrf.mxu0
  %3124 = vdwg.mxu0
  %3125 = vst [vmem:[%s9] sm:$0xff] %v3119
  %3126 = vst [vmem:[%s9 + $0x8] sm:$0xff] %v3122
  // Predicated region
  $region38: #{encoder_forward.1} parent=0 // pred_check
    _
  $region39: #{encoder_forward.1} parent=0 // pred_check_branch
    %3128 = sbr.rel (0) target = $region41
  $region40: #{encoder_forward.1} parent=0 // pred_region
    _
  $region41: #{encoder_forward.1} parent=0 // pred_fallthru
    _
  // Predicated region
  $region42: #{encoder_forward.1} parent=0 // pred_check
    _
  $region43: #{encoder_forward.1} parent=0 // pred_check_branch
    %3130 = sbr.rel (0) target = $region45
  $region44: #{encoder_forward.1} parent=0 // pred_region
    _
  $region45: #{encoder_forward.1} parent=0 // pred_fallthru
    _

</llo_original>
